<compile_context>
chip_gen: v7x
topology: tpu7x:2x2x1
jax: 0.10.0
libtpu: 0.0.40
codegen_flags: <defaults>
</compile_context>

<pallas_src>
import functools

import jax
import jax.numpy as jnp
from jax.experimental import pallas as pl
from jax.experimental.pallas import tpu as pltpu

_LANE = 128
_VMEM_LIMIT = 32 * 1024 * 1024  # safe on v5e/v6e/v7x; tiles below use far less
_TILE_CANDIDATES = (512, 256, 128)  # 512 keeps v5e happy; plenty for v6e/v7x


def _round_up(x, m):
    return ((x + m - 1) // m) * m


def _pick_tile(n_pad):
    for t in _TILE_CANDIDATES:
        if t <= n_pad and n_pad % t == 0:
            return t
    return n_pad


def _pad2d(a, rows, cols):
    return jnp.pad(a, ((0, rows - a.shape[0]), (0, cols - a.shape[1])))


# ----------------------------- Pallas kernels ------------------------------ #

def _activation_epilogue(out, activation, valid_cols):
    """Bias-added f32 tile -> activated tile (padded class cols masked)."""
    if activation == "relu":
        return jnp.maximum(out, 0.0)
    if activation == "log_softmax":
        col = jax.lax.broadcasted_iota(jnp.int32, out.shape, 1)
        mask = col < valid_cols
        masked = jnp.where(mask, out, -jnp.inf)
        m = jnp.max(masked, axis=-1, keepdims=True)
        shifted = masked - m
        lse = jnp.log(jnp.sum(jnp.exp(shifted), axis=-1, keepdims=True))
        return jnp.where(mask, shifted - lse, 0.0)
    return out  # "none"


def _gcn_fused_kernel(a_ref, x_ref, w_ref, b_ref, o_ref, acc_ref, *,
                      activation, valid_cols):
    """Fused layer tile: acc += A_tile @ X_tile; epilogue (acc @ W) + b + act.

    a_ref:   (TM, TK)              bf16 normalized adjacency tile
    x_ref:   (TK, Fin_pad)         bf16 node features tile
    w_ref:   (Fin_pad, Fout_pad)   bf16 weight (full)
    b_ref:   (1, Fout_pad)         f32 bias
    o_ref:   (TM, Fout_pad)        output tile (resident across the K axis)
    acc_ref: (TM, Fin_pad)         f32 VMEM accumulator scratch
    """
    k = pl.program_id(1)

    @pl.when(k == 0)
    def _():
        acc_ref[...] = jnp.zeros_like(acc_ref)

    acc_ref[...] += jnp.dot(
        a_ref[...], x_ref[...], preferred_element_type=jnp.float32
    )

    @pl.when(k == pl.num_programs(1) - 1)
    def _():
        agg = acc_ref[...].astype(w_ref.dtype)
        out = jnp.dot(agg, w_ref[...], preferred_element_type=jnp.float32)
        out = out + b_ref[...]
        out = _activation_epilogue(out, activation, valid_cols)
        o_ref[...] = out.astype(o_ref.dtype)


def _xw_kernel(x_ref, w_ref, o_ref):
    """Feature transform tile: o = X_tile @ W (bf16 inputs, f32 accumulate)."""
    o_ref[...] = jnp.dot(
        x_ref[...], w_ref[...], preferred_element_type=jnp.float32
    ).astype(o_ref.dtype)


def _aggregate_kernel(a_ref, xw_ref, b_ref, o_ref, acc_ref, *,
                      activation, valid_cols):
    """Aggregation tile: acc += A_tile @ XW_tile; epilogue adds bias + act."""
    k = pl.program_id(1)

    @pl.when(k == 0)
    def _():
        acc_ref[...] = jnp.zeros_like(acc_ref)

    acc_ref[...] += jnp.dot(
        a_ref[...], xw_ref[...], preferred_element_type=jnp.float32
    )

    @pl.when(k == pl.num_programs(1) - 1)
    def _():
        out = acc_ref[...] + b_ref[...]
        out = _activation_epilogue(out, activation, valid_cols)
        o_ref[...] = out.astype(o_ref.dtype)


# ------------------------------ layer wrapper ------------------------------ #

def gcn_layer(a_hat_p, x_p, w_p, b_p, *, activation, valid_cols, out_dtype):
    """One GCN layer on padded operands: act(A_hat @ (X @ W) + b)."""
    n_pad = a_hat_p.shape[0]
    fin_pad, fout_pad = w_p.shape

    tm = _pick_tile(n_pad)
    tk = _pick_tile(n_pad)
    out_bytes = jnp.dtype(out_dtype).itemsize
    transcendentals = n_pad * fout_pad if activation == "log_softmax" else 0
    cparams = pltpu.CompilerParams(
        dimension_semantics=("parallel", "arbitrary"),
        vmem_limit_bytes=_VMEM_LIMIT,
    )

    if fin_pad <= fout_pad:
        # ---- Fused: out = act((A_hat @ X) @ W + b), single kernel ----
        kernel = functools.partial(
            _gcn_fused_kernel, activation=activation, valid_cols=valid_cols
        )
        return pl.pallas_call(
            kernel,
            out_shape=jax.ShapeDtypeStruct((n_pad, fout_pad), out_dtype),
            grid=(n_pad // tm, n_pad // tk),
            in_specs=[
                pl.BlockSpec((tm, tk), lambda i, k: (i, k)),
                pl.BlockSpec((tk, fin_pad), lambda i, k: (k, 0)),
                pl.BlockSpec((fin_pad, fout_pad), lambda i, k: (0, 0)),
                pl.BlockSpec((1, fout_pad), lambda i, k: (0, 0)),
            ],
            out_specs=pl.BlockSpec((tm, fout_pad), lambda i, k: (i, 0)),
            scratch_shapes=[pltpu.VMEM((tm, fin_pad), jnp.float32)],
            compiler_params=cparams,
            cost_estimate=pl.CostEstimate(
                flops=2 * n_pad * n_pad * fin_pad
                      + 2 * n_pad * fin_pad * fout_pad,
                transcendentals=transcendentals,
                bytes_accessed=(n_pad * n_pad * 2 + n_pad * fin_pad * 2
                                + fin_pad * fout_pad * 2 + fout_pad * 4
                                + n_pad * fout_pad * out_bytes),
            ),
        )(a_hat_p, x_p, w_p, b_p)

    # ---- Transform-first: X @ W once (row-tiled), then aggregation ----
    xw = pl.pallas_call(
        _xw_kernel,
        out_shape=jax.ShapeDtypeStruct((n_pad, fout_pad), jnp.bfloat16),
        grid=(n_pad // tm,),
        in_specs=[
            pl.BlockSpec((tm, fin_pad), lambda i: (i, 0)),
            pl.BlockSpec((fin_pad, fout_pad), lambda i: (0, 0)),
        ],
        out_specs=pl.BlockSpec((tm, fout_pad), lambda i: (i, 0)),
        compiler_params=pltpu.CompilerParams(
            dimension_semantics=("parallel",),
            vmem_limit_bytes=_VMEM_LIMIT,
        ),
        cost_estimate=pl.CostEstimate(
            flops=2 * n_pad * fin_pad * fout_pad,
            transcendentals=0,
            bytes_accessed=(n_pad * fin_pad + fin_pad * fout_pad
                            + n_pad * fout_pad) * 2,
        ),
    )(x_p, w_p)

    kernel = functools.partial(
        _aggregate_kernel, activation=activation, valid_cols=valid_cols
    )
    return pl.pallas_call(
        kernel,
        out_shape=jax.ShapeDtypeStruct((n_pad, fout_pad), out_dtype),
        grid=(n_pad // tm, n_pad // tk),
        in_specs=[
            pl.BlockSpec((tm, tk), lambda i, k: (i, k)),
            pl.BlockSpec((tk, fout_pad), lambda i, k: (k, 0)),
            pl.BlockSpec((1, fout_pad), lambda i, k: (0, 0)),
        ],
        out_specs=pl.BlockSpec((tm, fout_pad), lambda i, k: (i, 0)),
        scratch_shapes=[pltpu.VMEM((tm, fout_pad), jnp.float32)],
        compiler_params=cparams,
        cost_estimate=pl.CostEstimate(
            flops=2 * n_pad * n_pad * fout_pad,
            transcendentals=transcendentals,
            bytes_accessed=(n_pad * n_pad * 2 + n_pad * fout_pad * 2
                            + fout_pad * 4 + n_pad * fout_pad * out_bytes),
        ),
    )(a_hat_p, xw, b_p)


# ----------------------------- glue (plain JAX) ----------------------------- #

def build_normalized_adjacency(edge_index, num_nodes):
    """Dense GCN normalization: D^-1/2 (A + I_remaining) D^-1/2, A[i,j]=1 for j->i."""
    src = edge_index[0]
    dst = edge_index[1]
    a = jnp.zeros((num_nodes, num_nodes), dtype=jnp.float32)
    a = a.at[dst, src].add(1.0)
    # add_remaining_self_loops: only nodes that lack a self-loop get one.
    diag = jnp.diagonal(a)
    a = a + jnp.diag(jnp.where(diag > 0.0, 0.0, 1.0))
    deg = jnp.sum(a, axis=1)
    dinv = jnp.where(deg > 0, 1.0 / jnp.sqrt(deg), 0.0)
    return dinv[:, None] * a * dinv[None, :]


def init_gcn_params(key, num_node_features, hidden_dim, num_classes,
                    num_hidden_layers):
    """Deterministic Glorot-uniform weights + zero biases, one per GCNConv."""
    dims = [num_node_features] + [hidden_dim] * num_hidden_layers + [num_classes]
    params = []
    for i in range(len(dims) - 1):
        key, wk = jax.random.split(key)
        fan_in, fan_out = dims[i], dims[i + 1]
        limit = jnp.sqrt(6.0 / (fan_in + fan_out))
        w = jax.random.uniform(wk, (fan_in, fan_out), jnp.float32,
                               minval=-limit, maxval=limit)
        b = jnp.zeros((fan_out,), jnp.float32)
        params.append((w, b))
    return params


@jax.jit
def gcn_forward(x, edge_index, params):
    """Mirrors GCN.forward: hidden layers with ReLU, final layer + log_softmax."""
    n, fin = x.shape
    n_pad = _round_up(n, _LANE)

    # Build A_hat once, pad + cast to bf16, reuse across all layers.
    a_hat = build_normalized_adjacency(edge_index, n)
    a_hat_p = _pad2d(a_hat, n_pad, n_pad).astype(jnp.bfloat16)

    h = _pad2d(x.astype(jnp.float32), n_pad,
               _round_up(fin, _LANE)).astype(jnp.bfloat16)

    num_layers = len(params)
    for i, (w, b) in enumerate(params):
        fin_i, fout_i = w.shape
        fin_pad = _round_up(fin_i, _LANE)
        fout_pad = _round_up(fout_i, _LANE)
        w_p = _pad2d(w, fin_pad, fout_pad).astype(jnp.bfloat16)
        b_p = jnp.pad(b, (0, fout_pad - fout_i)).astype(
            jnp.float32).reshape(1, fout_pad)

        is_last = (i == num_layers - 1)
        h = gcn_layer(
            a_hat_p, h, w_p, b_p,
            activation="log_softmax" if is_last else "relu",
            valid_cols=fout_i,
            out_dtype=jnp.float32 if is_last else jnp.bfloat16,
        )

    num_classes = params[-1][0].shape[1]
    return h[:n, :num_classes]


def gcn_reference(x, edge_index, params):
    """Pure-JAX f32 reference of the same forward pass."""
    a_hat = build_normalized_adjacency(edge_index, x.shape[0])
    h = x.astype(jnp.float32)
    for i, (w, b) in enumerate(params):
        h = a_hat @ (h @ w) + b
        if i < len(params) - 1:
            h = jnp.maximum(h, 0.0)
    return jax.nn.log_softmax(h, axis=1)


# ---------------------------------- main ------------------------------------ #

if __name__ == "__main__":
    key = jax.random.PRNGKey(0)

    num_nodes = 16
    num_node_features = 8
    hidden_dim = 32
    num_classes = 4
    num_hidden_layers = 2

    # Deterministic node features.
    key, xk, pk = jax.random.split(key, 3)
    x = jax.random.normal(xk, (num_nodes, num_node_features), jnp.float32)

    # Deterministic graph: a ring with edges in both directions.
    src = jnp.arange(num_nodes, dtype=jnp.int32)
    nxt = (src + 1) % num_nodes
    edge_index = jnp.stack(
        [jnp.concatenate([src, nxt]), jnp.concatenate([nxt, src])], axis=0
    )  # shape (2, 2*num_nodes)

    params = init_gcn_params(pk, num_node_features, hidden_dim, num_classes,
                             num_hidden_layers)

    out = gcn_forward(x, edge_index, params)
    out = jax.block_until_ready(out)

    # Sanity: shape, exact log-softmax normalization, and agreement with a
    # pure-JAX f32 reference (tolerance covers the bf16 MXU inputs).
    ref = gcn_reference(x, edge_index, params)
    row_logsumexp = jax.scipy.special.logsumexp(out, axis=1)
    assert out.shape == (num_nodes, num_classes)
    assert bool(jnp.all(jnp.abs(row_logsumexp) < 1e-4))
    assert bool(jnp.allclose(out, ref, atol=5e-2))

    print("KERNEL_OK")
</pallas_src>

<mosaic_0001>
module attributes {stable_mosaic.version = 11 : i64} {
  func.func private @main(%arg0: i32) attributes {dimension_semantics = [#tpu.dimension_semantics<core_parallel>], iteration_bounds = array<i64: 2>, tpu.core_type = #tpu.core_type<sc_scalar_subcore>, window_params = []} {
    return
  }
}

module attributes {stable_mosaic.version = 11 : i64} {
  func.func private @main(%arg0: i32) attributes {dimension_semantics = [#tpu.dimension_semantics<core_parallel>], iteration_bounds = array<i64: 2>, tpu.core_type = #tpu.core_type<sc_scalar_subcore>, window_params = []} {
    return
  }
}

module attributes {stable_mosaic.version = 11 : i64} {
  func.func @_gcn_fused_kernel(%arg0: i32, %arg1: i32, %arg2: memref<128x128xbf16, #tpu.memory_space<vmem>>, %arg3: memref<128x128xbf16, #tpu.memory_space<vmem>>, %arg4: memref<128x128xbf16, #tpu.memory_space<vmem>>, %arg5: memref<1x128xf32, #tpu.memory_space<vmem>>, %arg6: memref<128x128xbf16, #tpu.memory_space<vmem>>, %arg7: memref<128x128xf32, #tpu.memory_space<vmem>>) attributes {dimension_semantics = [#tpu.dimension_semantics<parallel>, #tpu.dimension_semantics<arbitrary>], iteration_bounds = array<i64: 1, 1>, scalar_prefetch = 0 : i64, scratch_operands = 1 : i64, tpu.core_type = #tpu.core_type<tc>, window_params = [{transform_indices = @transform_0, window_bounds = array<i64: 128, 128>}, {transform_indices = @transform_1, window_bounds = array<i64: 128, 128>}, {pipeline_mode = #tpu.pipeline_mode<synchronous>, transform_indices = @transform_2, window_bounds = array<i64: 128, 128>}, {pipeline_mode = #tpu.pipeline_mode<synchronous>, transform_indices = @transform_3, window_bounds = array<i64: 1, 128>}, {transform_indices = @transform_4, window_bounds = array<i64: 128, 128>}]} {
    %c0_i32 = arith.constant 0 : i32
    %0 = arith.cmpi eq, %arg1, %c0_i32 : i32
    %1 = arith.extui %0 : i1 to i32
    %c0_i32_0 = arith.constant 0 : i32
    %2 = arith.cmpi ne, %1, %c0_i32_0 : i32
    scf.if %2 {
      %cst_10 = arith.constant 0.000000e+00 : f32
      %12 = vector.broadcast %cst_10 : f32 to vector<128x128xf32>
      %c0_11 = arith.constant 0 : index
      %c0_12 = arith.constant 0 : index
      %13 = vector.load %arg7[%c0_11, %c0_12] : memref<128x128xf32, #tpu.memory_space<vmem>>, vector<128x128xf32>
      tpu.vector_store %arg7[%c0_11, %c0_12], %12 {strides = array<i32>} : memref<128x128xf32, #tpu.memory_space<vmem>>, vector<128x128xf32>,
    } else {
    }
    %c0 = arith.constant 0 : index
    %c0_1 = arith.constant 0 : index
    %3 = vector.load %arg7[%c0, %c0_1] : memref<128x128xf32, #tpu.memory_space<vmem>>, vector<128x128xf32>
    %c0_2 = arith.constant 0 : index
    %c0_3 = arith.constant 0 : index
    %4 = vector.load %arg2[%c0_2, %c0_3] : memref<128x128xbf16, #tpu.memory_space<vmem>>, vector<128x128xbf16>
    %c0_4 = arith.constant 0 : index
    %c0_5 = arith.constant 0 : index
    %5 = vector.load %arg3[%c0_4, %c0_5] : memref<128x128xbf16, #tpu.memory_space<vmem>>, vector<128x128xbf16>
    %cst = arith.constant dense<0.000000e+00> : vector<128x128xf32>
    %6 = tpu.matmul %4, %5, %cst {dimension_numbers = #tpu.dot_dimension_numbers<[1], [0], [0], [1], [0, 0, 1, 1], [], []>} : vector<128x128xbf16>, vector<128x128xbf16>, vector<128x128xf32> -> vector<128x128xf32>
    %7 = arith.addf %3, %6 : vector<128x128xf32>
    %c0_6 = arith.constant 0 : index
    %c0_7 = arith.constant 0 : index
    %8 = vector.load %arg7[%c0_6, %c0_7] : memref<128x128xf32, #tpu.memory_space<vmem>>, vector<128x128xf32>
    tpu.vector_store %arg7[%c0_6, %c0_7], %7 {strides = array<i32>} : memref<128x128xf32, #tpu.memory_space<vmem>>, vector<128x128xf32>,
    %c0_i32_8 = arith.constant 0 : i32
    %9 = arith.cmpi eq, %arg1, %c0_i32_8 : i32
    %10 = arith.extui %9 : i1 to i32
    %c0_i32_9 = arith.constant 0 : i32
    %11 = arith.cmpi ne, %10, %c0_i32_9 : i32
    scf.if %11 {
      %c0_10 = arith.constant 0 : index
      %c0_11 = arith.constant 0 : index
      %12 = vector.load %arg7[%c0_10, %c0_11] : memref<128x128xf32, #tpu.memory_space<vmem>>, vector<128x128xf32>
      %13 = arith.truncf %12 : vector<128x128xf32> to vector<128x128xbf16>
      %c0_12 = arith.constant 0 : index
      %c0_13 = arith.constant 0 : index
      %14 = vector.load %arg4[%c0_12, %c0_13] : memref<128x128xbf16, #tpu.memory_space<vmem>>, vector<128x128xbf16>
      %cst_14 = arith.constant dense<0.000000e+00> : vector<128x128xf32>
      %15 = tpu.matmul %13, %14, %cst_14 {dimension_numbers = #tpu.dot_dimension_numbers<[1], [0], [0], [1], [0, 0, 1, 1], [], []>} : vector<128x128xbf16>, vector<128x128xbf16>, vector<128x128xf32> -> vector<128x128xf32>
      %c0_15 = arith.constant 0 : index
      %c0_16 = arith.constant 0 : index
      %16 = vector.load %arg5[%c0_15, %c0_16] : memref<1x128xf32, #tpu.memory_space<vmem>>, vector<1x128xf32>
      %17 = vector.broadcast %16 : vector<1x128xf32> to vector<128x128xf32>
      %18 = arith.addf %15, %17 : vector<128x128xf32>
      %cst_17 = arith.constant 0.000000e+00 : f32
      %19 = vector.broadcast %cst_17 : f32 to vector<128x128xf32>
      %20 = arith.maximumf %18, %19 : vector<128x128xf32>
      %21 = arith.truncf %20 : vector<128x128xf32> to vector<128x128xbf16>
      %c0_18 = arith.constant 0 : index
      %c0_19 = arith.constant 0 : index
      %22 = vector.load %arg6[%c0_18, %c0_19] : memref<128x128xbf16, #tpu.memory_space<vmem>>, vector<128x128xbf16>
      tpu.vector_store %arg6[%c0_18, %c0_19], %21 {strides = array<i32>} : memref<128x128xbf16, #tpu.memory_space<vmem>>, vector<128x128xbf16>,
    } else {
    }
    return
  }
  func.func @transform_0(%arg0: i32, %arg1: i32) -> (i32, i32) {
    %c0_i32 = arith.constant 0 : i32
    return %arg0, %arg1 : i32, i32
  }
  func.func @transform_1(%arg0: i32, %arg1: i32) -> (i32, i32) {
    %c0_i32 = arith.constant 0 : i32
    %c0_i32_0 = arith.constant 0 : i32
    return %arg1, %c0_i32 : i32, i32
  }
  func.func @transform_2(%arg0: i32, %arg1: i32) -> (i32, i32) {
    %c0_i32 = arith.constant 0 : i32
    %c0_i32_0 = arith.constant 0 : i32
    %c0_i32_1 = arith.constant 0 : i32
    return %c0_i32, %c0_i32_0 : i32, i32
  }
  func.func @transform_3(%arg0: i32, %arg1: i32) -> (i32, i32) {
    %c0_i32 = arith.constant 0 : i32
    %c0_i32_0 = arith.constant 0 : i32
    %c0_i32_1 = arith.constant 0 : i32
    return %c0_i32, %c0_i32_0 : i32, i32
  }
  func.func @transform_4(%arg0: i32, %arg1: i32) -> (i32, i32) {
    %c0_i32 = arith.constant 0 : i32
    %c0_i32_0 = arith.constant 0 : i32
    return %arg0, %c0_i32 : i32, i32
  }
}

module attributes {stable_mosaic.version = 11 : i64} {
  func.func @_gcn_fused_kernel(%arg0: i32, %arg1: i32, %arg2: memref<128x128xbf16, #tpu.memory_space<vmem>>, %arg3: memref<128x128xbf16, #tpu.memory_space<vmem>>, %arg4: memref<128x128xbf16, #tpu.memory_space<vmem>>, %arg5: memref<1x128xf32, #tpu.memory_space<vmem>>, %arg6: memref<128x128xf32, #tpu.memory_space<vmem>>, %arg7: memref<128x128xf32, #tpu.memory_space<vmem>>) attributes {dimension_semantics = [#tpu.dimension_semantics<parallel>, #tpu.dimension_semantics<arbitrary>], iteration_bounds = array<i64: 1, 1>, scalar_prefetch = 0 : i64, scratch_operands = 1 : i64, tpu.core_type = #tpu.core_type<tc>, window_params = [{transform_indices = @transform_0, window_bounds = array<i64: 128, 128>}, {transform_indices = @transform_1, window_bounds = array<i64: 128, 128>}, {pipeline_mode = #tpu.pipeline_mode<synchronous>, transform_indices = @transform_2, window_bounds = array<i64: 128, 128>}, {pipeline_mode = #tpu.pipeline_mode<synchronous>, transform_indices = @transform_3, window_bounds = array<i64: 1, 128>}, {transform_indices = @transform_4, window_bounds = array<i64: 128, 128>}]} {
    %c0_i32 = arith.constant 0 : i32
    %0 = arith.cmpi eq, %arg1, %c0_i32 : i32
    %1 = arith.extui %0 : i1 to i32
    %c0_i32_0 = arith.constant 0 : i32
    %2 = arith.cmpi ne, %1, %c0_i32_0 : i32
    scf.if %2 {
      %cst_10 = arith.constant 0.000000e+00 : f32
      %12 = vector.broadcast %cst_10 : f32 to vector<128x128xf32>
      %c0_11 = arith.constant 0 : index
      %c0_12 = arith.constant 0 : index
      %13 = vector.load %arg7[%c0_11, %c0_12] : memref<128x128xf32, #tpu.memory_space<vmem>>, vector<128x128xf32>
      tpu.vector_store %arg7[%c0_11, %c0_12], %12 {strides = array<i32>} : memref<128x128xf32, #tpu.memory_space<vmem>>, vector<128x128xf32>,
    } else {
    }
    %c0 = arith.constant 0 : index
    %c0_1 = arith.constant 0 : index
    %3 = vector.load %arg7[%c0, %c0_1] : memref<128x128xf32, #tpu.memory_space<vmem>>, vector<128x128xf32>
    %c0_2 = arith.constant 0 : index
    %c0_3 = arith.constant 0 : index
    %4 = vector.load %arg2[%c0_2, %c0_3] : memref<128x128xbf16, #tpu.memory_space<vmem>>, vector<128x128xbf16>
    %c0_4 = arith.constant 0 : index
    %c0_5 = arith.constant 0 : index
    %5 = vector.load %arg3[%c0_4, %c0_5] : memref<128x128xbf16, #tpu.memory_space<vmem>>, vector<128x128xbf16>
    %cst = arith.constant dense<0.000000e+00> : vector<128x128xf32>
    %6 = tpu.matmul %4, %5, %cst {dimension_numbers = #tpu.dot_dimension_numbers<[1], [0], [0], [1], [0, 0, 1, 1], [], []>} : vector<128x128xbf16>, vector<128x128xbf16>, vector<128x128xf32> -> vector<128x128xf32>
    %7 = arith.addf %3, %6 : vector<128x128xf32>
    %c0_6 = arith.constant 0 : index
    %c0_7 = arith.constant 0 : index
    %8 = vector.load %arg7[%c0_6, %c0_7] : memref<128x128xf32, #tpu.memory_space<vmem>>, vector<128x128xf32>
    tpu.vector_store %arg7[%c0_6, %c0_7], %7 {strides = array<i32>} : memref<128x128xf32, #tpu.memory_space<vmem>>, vector<128x128xf32>,
    %c0_i32_8 = arith.constant 0 : i32
    %9 = arith.cmpi eq, %arg1, %c0_i32_8 : i32
    %10 = arith.extui %9 : i1 to i32
    %c0_i32_9 = arith.constant 0 : i32
    %11 = arith.cmpi ne, %10, %c0_i32_9 : i32
    scf.if %11 {
      %c0_10 = arith.constant 0 : index
      %c0_11 = arith.constant 0 : index
      %12 = vector.load %arg7[%c0_10, %c0_11] : memref<128x128xf32, #tpu.memory_space<vmem>>, vector<128x128xf32>
      %13 = arith.truncf %12 : vector<128x128xf32> to vector<128x128xbf16>
      %c0_12 = arith.constant 0 : index
      %c0_13 = arith.constant 0 : index
      %14 = vector.load %arg4[%c0_12, %c0_13] : memref<128x128xbf16, #tpu.memory_space<vmem>>, vector<128x128xbf16>
      %cst_14 = arith.constant dense<0.000000e+00> : vector<128x128xf32>
      %15 = tpu.matmul %13, %14, %cst_14 {dimension_numbers = #tpu.dot_dimension_numbers<[1], [0], [0], [1], [0, 0, 1, 1], [], []>} : vector<128x128xbf16>, vector<128x128xbf16>, vector<128x128xf32> -> vector<128x128xf32>
      %c0_15 = arith.constant 0 : index
      %c0_16 = arith.constant 0 : index
      %16 = vector.load %arg5[%c0_15, %c0_16] : memref<1x128xf32, #tpu.memory_space<vmem>>, vector<1x128xf32>
      %17 = vector.broadcast %16 : vector<1x128xf32> to vector<128x128xf32>
      %18 = arith.addf %15, %17 : vector<128x128xf32>
      %19 = tpu.iota {dimensions = array<i32: 1>} : vector<128x128xi32>
      %c4_i32 = arith.constant 4 : i32
      %20 = vector.broadcast %c4_i32 : i32 to vector<128x128xi32>
      %21 = arith.cmpi slt, %19, %20 : vector<128x128xi32>
      %cst_17 = arith.constant 0xFF800000 : f32
      %22 = vector.broadcast %cst_17 : f32 to vector<128x128xf32>
      %23 = arith.select %21, %18, %22 : vector<128x128xi1>, vector<128x128xf32>
      %cst_18 = arith.constant dense<0xFF800000> : vector<128xf32>
      %24 = vector.multi_reduction <maximumf>, %23, %cst_18 [1] : vector<128x128xf32> to vector<128xf32>
      %25 = vector.shape_cast %24 : vector<128xf32> to vector<128x1xf32>
      %26 = vector.broadcast %25 : vector<128x1xf32> to vector<128x128xf32>
      %27 = arith.subf %23, %26 : vector<128x128xf32>
      %28 = math.exp %27 : vector<128x128xf32>
      %cst_19 = arith.constant dense<0.000000e+00> : vector<128xf32>
      %29 = vector.multi_reduction <add>, %28, %cst_19 [1] : vector<128x128xf32> to vector<128xf32>
      %30 = vector.shape_cast %29 : vector<128xf32> to vector<128x1xf32>
      %31 = math.log %30 : vector<128x1xf32>
      %32 = vector.broadcast %31 : vector<128x1xf32> to vector<128x128xf32>
      %33 = arith.subf %27, %32 : vector<128x128xf32>
      %cst_20 = arith.constant 0.000000e+00 : f32
      %34 = vector.broadcast %cst_20 : f32 to vector<128x128xf32>
      %35 = arith.select %21, %33, %34 : vector<128x128xi1>, vector<128x128xf32>
      %c0_21 = arith.constant 0 : index
      %c0_22 = arith.constant 0 : index
      %36 = vector.load %arg6[%c0_21, %c0_22] : memref<128x128xf32, #tpu.memory_space<vmem>>, vector<128x128xf32>
      tpu.vector_store %arg6[%c0_21, %c0_22], %35 {strides = array<i32>} : memref<128x128xf32, #tpu.memory_space<vmem>>, vector<128x128xf32>,
    } else {
    }
    return
  }
  func.func @transform_0(%arg0: i32, %arg1: i32) -> (i32, i32) {
    %c0_i32 = arith.constant 0 : i32
    return %arg0, %arg1 : i32, i32
  }
  func.func @transform_1(%arg0: i32, %arg1: i32) -> (i32, i32) {
    %c0_i32 = arith.constant 0 : i32
    %c0_i32_0 = arith.constant 0 : i32
    return %arg1, %c0_i32 : i32, i32
  }
  func.func @transform_2(%arg0: i32, %arg1: i32) -> (i32, i32) {
    %c0_i32 = arith.constant 0 : i32
    %c0_i32_0 = arith.constant 0 : i32
    %c0_i32_1 = arith.constant 0 : i32
    return %c0_i32, %c0_i32_0 : i32, i32
  }
  func.func @transform_3(%arg0: i32, %arg1: i32) -> (i32, i32) {
    %c0_i32 = arith.constant 0 : i32
    %c0_i32_0 = arith.constant 0 : i32
    %c0_i32_1 = arith.constant 0 : i32
    return %c0_i32, %c0_i32_0 : i32, i32
  }
  func.func @transform_4(%arg0: i32, %arg1: i32) -> (i32, i32) {
    %c0_i32 = arith.constant 0 : i32
    %c0_i32_0 = arith.constant 0 : i32
    return %arg0, %c0_i32 : i32, i32
  }
}

</mosaic_0001>

<llo_original>
// kernel: gcn_forward.3
$region0: #{gcn_forward.3}
  #allocation0 [shape = 'u32[]', space=smem, size = 0x4, offset = 0x4, fixed_abs, tag = 'smem constant byte address 0x4 - core index']
  #allocation1 [shape = 'u32[144,128]{1,0:T(1,128)}', space=vmem, size = 0x12000, scoped, tag = 'internal scratch']
  #allocation2 [shape = 'f32[128,128]{1,0:T(8,128)}', space=vmem, size = 0x10000, scoped, tag = 'scratch operand']
  %s0 = inlined_call_operand.vmem [shape: bf16[128,128], index: 0, kind: input, shape index: {}]
  %s1 = inlined_call_operand.vmem [shape: bf16[128,128], index: 1, kind: input, shape index: {}]
  %s2 = inlined_call_operand.vmem [shape: bf16[128,128], index: 2, kind: input, shape index: {}]
  %s3 = inlined_call_operand.vmem [shape: f32[1,128], index: 3, kind: input, shape index: {}]
  %s4 = inlined_call_operand.vmem [shape: bf16[128,128], index: 4, kind: output, shape index: {}]
  %s5 = sld [smem:[#allocation0]]
  $region34: #{gcn_forward.3} parent=0
    _
  %s7 = ssub.s32 1, %s5
  %s8 = scalar_select 0, %s7, %s5
  // Predicated region
  $region2: #{gcn_forward.3} parent=0 // pred_check
    _
  $region3: #{gcn_forward.3} parent=0 // pred_check_branch
    %10 = sbr.rel (0) target = $region5
  $region4: #{gcn_forward.3} parent=0 // pred_region
    _
  $region5: #{gcn_forward.3} parent=0 // pred_fallthru
    _
  // Predicated region
  $region6: #{gcn_forward.3} parent=0 // pred_check
    _
  $region7: #{gcn_forward.3} parent=0 // pred_check_branch
    %12 = sbr.rel (0) target = $region9
  $region8: #{gcn_forward.3} parent=0 // pred_region
    _
  $region9: #{gcn_forward.3} parent=0 // pred_fallthru
    _
  // Predicated region
  $region10: #{gcn_forward.3} parent=0 // pred_check
    _
  $region11: #{gcn_forward.3} parent=0 // pred_check_branch
    %14 = sbr.rel (0) target = $region13
  $region12: #{gcn_forward.3} parent=0 // pred_region
    _
  $region13: #{gcn_forward.3} parent=0 // pred_fallthru
    _
  // Predicated region
  $region14: #{gcn_forward.3} parent=0 // pred_check
    _
  $region15: #{gcn_forward.3} parent=0 // pred_check_branch
    %16 = sbr.rel (0) target = $region17
  $region16: #{gcn_forward.3} parent=0 // pred_region
    _
  $region17: #{gcn_forward.3} parent=0 // pred_fallthru
    _
  %p18 = scmp.eq.s32.totalorder 0, 0
  // Predicated region
  $region18: #{gcn_forward.3} parent=0 // pred_check
    %p19 = pneg %p18
  $region19: #{gcn_forward.3} parent=0 // pred_check_branch
    %21 = sbr.rel (%p19) target = $region21
  $region20: #{gcn_forward.3} parent=0 // pred_region
    %22 = vst [vmem:[#allocation2] sm:$0xff] 0.0
    %23 = vst [vmem:[#allocation2 + $0x8] sm:$0xff] 0.0
    %24 = vst [vmem:[#allocation2 + $0x10] sm:$0xff] 0.0
    %25 = vst [vmem:[#allocation2 + $0x18] sm:$0xff] 0.0
    %26 = vst [vmem:[#allocation2 + $0x20] sm:$0xff] 0.0
    %27 = vst [vmem:[#allocation2 + $0x28] sm:$0xff] 0.0
    %28 = vst [vmem:[#allocation2 + $0x30] sm:$0xff] 0.0
    %29 = vst [vmem:[#allocation2 + $0x38] sm:$0xff] 0.0
    %30 = vst [vmem:[#allocation2 + $0x40] sm:$0xff] 0.0
    %31 = vst [vmem:[#allocation2 + $0x48] sm:$0xff] 0.0
    %32 = vst [vmem:[#allocation2 + $0x50] sm:$0xff] 0.0
    %33 = vst [vmem:[#allocation2 + $0x58] sm:$0xff] 0.0
    %34 = vst [vmem:[#allocation2 + $0x60] sm:$0xff] 0.0
    %35 = vst [vmem:[#allocation2 + $0x68] sm:$0xff] 0.0
    %36 = vst [vmem:[#allocation2 + $0x70] sm:$0xff] 0.0
    %37 = vst [vmem:[#allocation2 + $0x78] sm:$0xff] 0.0
  $region21: #{gcn_forward.3} parent=0 // pred_fallthru
    _
  %v38 = vld [vmem:[#allocation2] sm:$0xff]
  %v39 = vld [vmem:[#allocation2 + $0x8] sm:$0xff]
  %v40 = vld [vmem:[#allocation2 + $0x10] sm:$0xff]
  %v41 = vld [vmem:[#allocation2 + $0x18] sm:$0xff]
  %v42 = vld [vmem:[#allocation2 + $0x20] sm:$0xff]
  %v43 = vld [vmem:[#allocation2 + $0x28] sm:$0xff]
  %v44 = vld [vmem:[#allocation2 + $0x30] sm:$0xff]
  %v45 = vld [vmem:[#allocation2 + $0x38] sm:$0xff]
  %v46 = vld [vmem:[#allocation2 + $0x40] sm:$0xff]
  %v47 = vld [vmem:[#allocation2 + $0x48] sm:$0xff]
  %v48 = vld [vmem:[#allocation2 + $0x50] sm:$0xff]
  %v49 = vld [vmem:[#allocation2 + $0x58] sm:$0xff]
  %v50 = vld [vmem:[#allocation2 + $0x60] sm:$0xff]
  %v51 = vld [vmem:[#allocation2 + $0x68] sm:$0xff]
  %v52 = vld [vmem:[#allocation2 + $0x70] sm:$0xff]
  %v53 = vld [vmem:[#allocation2 + $0x78] sm:$0xff]
  %v54 = vld [vmem:[%s0] sm:$0xf]
  %v55 = vld [vmem:[%s0 + $0x4] sm:$0xf]
  %v56 = vld [vmem:[%s0 + $0x8] sm:$0xf]
  %v57 = vld [vmem:[%s0 + $0xc] sm:$0xf]
  %v58 = vld [vmem:[%s0 + $0x10] sm:$0xf]
  %v59 = vld [vmem:[%s0 + $0x14] sm:$0xf]
  %v60 = vld [vmem:[%s0 + $0x18] sm:$0xf]
  %v61 = vld [vmem:[%s0 + $0x1c] sm:$0xf]
  %v62 = vld [vmem:[%s0 + $0x20] sm:$0xf]
  %v63 = vld [vmem:[%s0 + $0x24] sm:$0xf]
  %v64 = vld [vmem:[%s0 + $0x28] sm:$0xf]
  %v65 = vld [vmem:[%s0 + $0x2c] sm:$0xf]
  %v66 = vld [vmem:[%s0 + $0x30] sm:$0xf]
  %v67 = vld [vmem:[%s0 + $0x34] sm:$0xf]
  %v68 = vld [vmem:[%s0 + $0x38] sm:$0xf]
  %v69 = vld [vmem:[%s0 + $0x3c] sm:$0xf]
  %v70 = vld [vmem:[%s1] sm:$0xf]
  %v71 = vld [vmem:[%s1 + $0x4] sm:$0xf]
  %v72 = vld [vmem:[%s1 + $0x8] sm:$0xf]
  %v73 = vld [vmem:[%s1 + $0xc] sm:$0xf]
  %v74 = vld [vmem:[%s1 + $0x10] sm:$0xf]
  %v75 = vld [vmem:[%s1 + $0x14] sm:$0xf]
  %v76 = vld [vmem:[%s1 + $0x18] sm:$0xf]
  %v77 = vld [vmem:[%s1 + $0x1c] sm:$0xf]
  %v78 = vld [vmem:[%s1 + $0x20] sm:$0xf]
  %v79 = vld [vmem:[%s1 + $0x24] sm:$0xf]
  %v80 = vld [vmem:[%s1 + $0x28] sm:$0xf]
  %v81 = vld [vmem:[%s1 + $0x2c] sm:$0xf]
  %v82 = vld [vmem:[%s1 + $0x30] sm:$0xf]
  %v83 = vld [vmem:[%s1 + $0x34] sm:$0xf]
  %v84 = vld [vmem:[%s1 + $0x38] sm:$0xf]
  %v85 = vld [vmem:[%s1 + $0x3c] sm:$0xf]
  %v102 = vunpack.c.l.b16 %v54
  %v103 = vunpack.c.l.b16 %v55
  %v104 = vunpack.c.l.b16 %v56
  %v105 = vunpack.c.l.b16 %v57
  %v106 = vunpack.c.l.b16 %v58
  %v107 = vunpack.c.l.b16 %v59
  %v108 = vunpack.c.l.b16 %v60
  %v109 = vunpack.c.l.b16 %v61
  %v110 = vunpack.c.l.b16 %v62
  %v111 = vunpack.c.l.b16 %v63
  %v112 = vunpack.c.l.b16 %v64
  %v113 = vunpack.c.l.b16 %v65
  %v114 = vunpack.c.l.b16 %v66
  %v115 = vunpack.c.l.b16 %v67
  %v116 = vunpack.c.l.b16 %v68
  %v117 = vunpack.c.l.b16 %v69
  %v118 = vpack.c.b16 %v103, %v102
  %v119 = vpack.c.b16 %v105, %v104
  %v120 = vpack.c.b16 %v107, %v106
  %v121 = vpack.c.b16 %v109, %v108
  %v122 = vpack.c.b16 %v111, %v110
  %v123 = vpack.c.b16 %v113, %v112
  %v124 = vpack.c.b16 %v115, %v114
  %v125 = vpack.c.b16 %v117, %v116
  %v150 = vunpack.c.l.b16 %v70
  %v151 = vunpack.c.l.b16 %v71
  %v152 = vunpack.c.l.b16 %v72
  %v153 = vunpack.c.l.b16 %v73
  %v154 = vunpack.c.l.b16 %v74
  %v155 = vunpack.c.l.b16 %v75
  %v156 = vunpack.c.l.b16 %v76
  %v157 = vunpack.c.l.b16 %v77
  %v158 = vunpack.c.l.b16 %v78
  %v159 = vunpack.c.l.b16 %v79
  %v160 = vunpack.c.l.b16 %v80
  %v161 = vunpack.c.l.b16 %v81
  %v162 = vunpack.c.l.b16 %v82
  %v163 = vunpack.c.l.b16 %v83
  %v164 = vunpack.c.l.b16 %v84
  %v165 = vunpack.c.l.b16 %v85
  %v166 = vpack.c.b16 %v151, %v150
  %v167 = vpack.c.b16 %v153, %v152
  %v168 = vpack.c.b16 %v155, %v154
  %v169 = vpack.c.b16 %v157, %v156
  %v170 = vpack.c.b16 %v159, %v158
  %v171 = vpack.c.b16 %v161, %v160
  %v172 = vpack.c.b16 %v163, %v162
  %v173 = vpack.c.b16 %v165, %v164
  %182 = vmatprep.subr.bf16.mxu0 0
  %183 = vmatpush1.bf16.msra.mxu0 %v166
  %184 = vmatprep.subr.bf16.mxu0 0
  %185 = vmatpush1.bf16.msra.mxu0 %v167
  %186 = vmatprep.subr.bf16.mxu0 0
  %187 = vmatpush1.bf16.msra.mxu0 %v168
  %188 = vmatprep.subr.bf16.mxu0 0
  %189 = vmatpush1.bf16.msra.mxu0 %v169
  %190 = vmatprep.subr.bf16.mxu0 0
  %191 = vmatpush1.bf16.msra.mxu0 %v170
  %192 = vmatprep.subr.bf16.mxu0 0
  %193 = vmatpush1.bf16.msra.mxu0 %v171
  %194 = vmatprep.subr.bf16.mxu0 0
  %195 = vmatpush1.bf16.msra.mxu0 %v172
  %196 = vmatprep.subr.bf16.mxu0 0
  %197 = vmatpush1.bf16.msra.mxu0 %v173
  %198 = vmatprep.subr.bf16.mxu0 0
  %199 = vmatpush1.bf16.msra.mxu0 0
  %200 = vmatprep.subr.bf16.mxu0 0
  %201 = vmatpush1.bf16.msra.mxu0 0
  %202 = vmatprep.subr.bf16.mxu0 0
  %203 = vmatpush1.bf16.msra.mxu0 0
  %204 = vmatprep.subr.bf16.mxu0 0
  %205 = vmatpush1.bf16.msra.mxu0 0
  %206 = vmatprep.subr.bf16.mxu0 0
  %207 = vmatpush1.bf16.msra.mxu0 0
  %208 = vmatprep.subr.bf16.mxu0 0
  %209 = vmatpush1.bf16.msra.mxu0 0
  %210 = vmatprep.subr.bf16.mxu0 0
  %211 = vmatpush1.bf16.msra.mxu0 0
  %212 = vmatprep.subr.bf16.mxu0 0
  %213 = vmatpush1.bf16.msra.mxu0 0
  %214 = vmatprep.mubr.bf16.mxu0 0
  %215 = vmatmul.mubr.bf16.gmra.mrb[0].mxu0 %v118
  %v216 = vpop.f32.mrb[0].mxu0
  %v217 = vadd.f32 0.0, %v216
  %v218 = vpop.f32.mrb[0].mxu0
  %v219 = vpop.f32.mrb[0].mxu0
  %v220 = vadd.f32 0.0, %v219
  %v221 = vpop.f32.mrb[0].mxu0
  %222 = vmatprep.mubr.bf16.mxu0 0
  %223 = vmatmul.mubr.bf16.gmra.mrb[0].mxu0 %v119
  %v224 = vpop.f32.mrb[0].mxu0
  %v225 = vadd.f32 0.0, %v224
  %v226 = vpop.f32.mrb[0].mxu0
  %v227 = vpop.f32.mrb[0].mxu0
  %v228 = vadd.f32 0.0, %v227
  %v229 = vpop.f32.mrb[0].mxu0
  %230 = vmatprep.mubr.bf16.mxu0 0
  %231 = vmatmul.mubr.bf16.gmra.mrb[0].mxu0 %v120
  %v232 = vpop.f32.mrb[0].mxu0
  %v233 = vadd.f32 0.0, %v232
  %v234 = vpop.f32.mrb[0].mxu0
  %v235 = vpop.f32.mrb[0].mxu0
  %v236 = vadd.f32 0.0, %v235
  %v237 = vpop.f32.mrb[0].mxu0
  %238 = vmatprep.mubr.bf16.mxu0 0
  %239 = vmatmul.mubr.bf16.gmra.mrb[0].mxu0 %v121
  %v240 = vpop.f32.mrb[0].mxu0
  %v241 = vadd.f32 0.0, %v240
  %v242 = vpop.f32.mrb[0].mxu0
  %v243 = vpop.f32.mrb[0].mxu0
  %v244 = vadd.f32 0.0, %v243
  %v245 = vpop.f32.mrb[0].mxu0
  %246 = vmatprep.mubr.bf16.mxu0 0
  %247 = vmatmul.mubr.bf16.gmra.mrb[0].mxu0 %v122
  %v248 = vpop.f32.mrb[0].mxu0
  %v249 = vadd.f32 0.0, %v248
  %v250 = vpop.f32.mrb[0].mxu0
  %v251 = vpop.f32.mrb[0].mxu0
  %v252 = vadd.f32 0.0, %v251
  %v253 = vpop.f32.mrb[0].mxu0
  %254 = vmatprep.mubr.bf16.mxu0 0
  %255 = vmatmul.mubr.bf16.gmra.mrb[0].mxu0 %v123
  %v256 = vpop.f32.mrb[0].mxu0
  %v257 = vadd.f32 0.0, %v256
  %v258 = vpop.f32.mrb[0].mxu0
  %v259 = vpop.f32.mrb[0].mxu0
  %v260 = vadd.f32 0.0, %v259
  %v261 = vpop.f32.mrb[0].mxu0
  %262 = vmatprep.mubr.bf16.mxu0 0
  %263 = vmatmul.mubr.bf16.gmra.mrb[0].mxu0 %v124
  %v264 = vpop.f32.mrb[0].mxu0
  %v265 = vadd.f32 0.0, %v264
  %v266 = vpop.f32.mrb[0].mxu0
  %v267 = vpop.f32.mrb[0].mxu0
  %v268 = vadd.f32 0.0, %v267
  %v269 = vpop.f32.mrb[0].mxu0
  %270 = vmatprep.mubr.bf16.mxu0 0
  %271 = vmatmul.mubr.bf16.gmra.mrb[0].mxu0 %v125
  %v272 = vpop.f32.mrb[0].mxu0
  %v273 = vadd.f32 0.0, %v272
  %v274 = vpop.f32.mrb[0].mxu0
  %v275 = vpop.f32.mrb[0].mxu0
  %v276 = vadd.f32 0.0, %v275
  %v277 = vpop.f32.mrb[0].mxu0
  %278 = vdwg.mxu0
  %v279 = vadd.f32 %v38, %v217
  %v280 = vadd.f32 %v39, %v220
  %v281 = vadd.f32 %v40, %v225
  %v282 = vadd.f32 %v41, %v228
  %v283 = vadd.f32 %v42, %v233
  %v284 = vadd.f32 %v43, %v236
  %v285 = vadd.f32 %v44, %v241
  %v286 = vadd.f32 %v45, %v244
  %v287 = vadd.f32 %v46, %v249
  %v288 = vadd.f32 %v47, %v252
  %v289 = vadd.f32 %v48, %v257
  %v290 = vadd.f32 %v49, %v260
  %v291 = vadd.f32 %v50, %v265
  %v292 = vadd.f32 %v51, %v268
  %v293 = vadd.f32 %v52, %v273
  %v294 = vadd.f32 %v53, %v276
  %295 = vst [vmem:[#allocation2] sm:$0xff] %v279
  %296 = vst [vmem:[#allocation2 + $0x8] sm:$0xff] %v280
  %297 = vst [vmem:[#allocation2 + $0x10] sm:$0xff] %v281
  %298 = vst [vmem:[#allocation2 + $0x18] sm:$0xff] %v282
  %299 = vst [vmem:[#allocation2 + $0x20] sm:$0xff] %v283
  %300 = vst [vmem:[#allocation2 + $0x28] sm:$0xff] %v284
  %301 = vst [vmem:[#allocation2 + $0x30] sm:$0xff] %v285
  %302 = vst [vmem:[#allocation2 + $0x38] sm:$0xff] %v286
  %303 = vst [vmem:[#allocation2 + $0x40] sm:$0xff] %v287
  %304 = vst [vmem:[#allocation2 + $0x48] sm:$0xff] %v288
  %305 = vst [vmem:[#allocation2 + $0x50] sm:$0xff] %v289
  %306 = vst [vmem:[#allocation2 + $0x58] sm:$0xff] %v290
  %307 = vst [vmem:[#allocation2 + $0x60] sm:$0xff] %v291
  %308 = vst [vmem:[#allocation2 + $0x68] sm:$0xff] %v292
  %309 = vst [vmem:[#allocation2 + $0x70] sm:$0xff] %v293
  %310 = vst [vmem:[#allocation2 + $0x78] sm:$0xff] %v294
  // Predicated region
  $region22: #{gcn_forward.3} parent=0 // pred_check
    %p311 = pneg %p18
  $region23: #{gcn_forward.3} parent=0 // pred_check_branch
    %313 = sbr.rel (%p311) target = $region25
  $region24: #{gcn_forward.3} parent=0 // pred_region
    %v314 = vld [vmem:[#allocation2] sm:$0xff]
    %v315 = vld [vmem:[#allocation2 + $0x8] sm:$0xff]
    %v316 = vld [vmem:[#allocation2 + $0x10] sm:$0xff]
    %v317 = vld [vmem:[#allocation2 + $0x18] sm:$0xff]
    %v318 = vld [vmem:[#allocation2 + $0x20] sm:$0xff]
    %v319 = vld [vmem:[#allocation2 + $0x28] sm:$0xff]
    %v320 = vld [vmem:[#allocation2 + $0x30] sm:$0xff]
    %v321 = vld [vmem:[#allocation2 + $0x38] sm:$0xff]
    %v322 = vld [vmem:[#allocation2 + $0x40] sm:$0xff]
    %v323 = vld [vmem:[#allocation2 + $0x48] sm:$0xff]
    %v324 = vld [vmem:[#allocation2 + $0x50] sm:$0xff]
    %v325 = vld [vmem:[#allocation2 + $0x58] sm:$0xff]
    %v326 = vld [vmem:[#allocation2 + $0x60] sm:$0xff]
    %v327 = vld [vmem:[#allocation2 + $0x68] sm:$0xff]
    %v328 = vld [vmem:[#allocation2 + $0x70] sm:$0xff]
    %v329 = vld [vmem:[#allocation2 + $0x78] sm:$0xff]
    %v330 = vpack.c.bf16 %v315, %v314
    %v331 = vpack.c.bf16 %v317, %v316
    %v332 = vpack.c.bf16 %v319, %v318
    %v333 = vpack.c.bf16 %v321, %v320
    %v334 = vpack.c.bf16 %v323, %v322
    %v335 = vpack.c.bf16 %v325, %v324
    %v336 = vpack.c.bf16 %v327, %v326
    %v337 = vpack.c.bf16 %v329, %v328
    %v338 = vld [vmem:[%s2] sm:$0xf]
    %v339 = vld [vmem:[%s2 + $0x4] sm:$0xf]
    %v340 = vld [vmem:[%s2 + $0x8] sm:$0xf]
    %v341 = vld [vmem:[%s2 + $0xc] sm:$0xf]
    %v342 = vld [vmem:[%s2 + $0x10] sm:$0xf]
    %v343 = vld [vmem:[%s2 + $0x14] sm:$0xf]
    %v344 = vld [vmem:[%s2 + $0x18] sm:$0xf]
    %v345 = vld [vmem:[%s2 + $0x1c] sm:$0xf]
    %v346 = vld [vmem:[%s2 + $0x20] sm:$0xf]
    %v347 = vld [vmem:[%s2 + $0x24] sm:$0xf]
    %v348 = vld [vmem:[%s2 + $0x28] sm:$0xf]
    %v349 = vld [vmem:[%s2 + $0x2c] sm:$0xf]
    %v350 = vld [vmem:[%s2 + $0x30] sm:$0xf]
    %v351 = vld [vmem:[%s2 + $0x34] sm:$0xf]
    %v352 = vld [vmem:[%s2 + $0x38] sm:$0xf]
    %v353 = vld [vmem:[%s2 + $0x3c] sm:$0xf]
    %v354 = vld [vmem:[%s3] sm:$0x1]
    %v356 = vlaneseq
    %v357 = vshrl.u32 %v356, 7
    %v358 = vsub.s32 0, %v357
    %v359 = vrot.slane %v354, %v358
    %v377 = vunpack.c.l.b16 %v338
    %v378 = vunpack.c.l.b16 %v339
    %v379 = vunpack.c.l.b16 %v340
    %v380 = vunpack.c.l.b16 %v341
    %v381 = vunpack.c.l.b16 %v342
    %v382 = vunpack.c.l.b16 %v343
    %v383 = vunpack.c.l.b16 %v344
    %v384 = vunpack.c.l.b16 %v345
    %v385 = vunpack.c.l.b16 %v346
    %v386 = vunpack.c.l.b16 %v347
    %v387 = vunpack.c.l.b16 %v348
    %v388 = vunpack.c.l.b16 %v349
    %v389 = vunpack.c.l.b16 %v350
    %v390 = vunpack.c.l.b16 %v351
    %v391 = vunpack.c.l.b16 %v352
    %v392 = vunpack.c.l.b16 %v353
    %v393 = vpack.c.b16 %v378, %v377
    %v394 = vpack.c.b16 %v380, %v379
    %v395 = vpack.c.b16 %v382, %v381
    %v396 = vpack.c.b16 %v384, %v383
    %v397 = vpack.c.b16 %v386, %v385
    %v398 = vpack.c.b16 %v388, %v387
    %v399 = vpack.c.b16 %v390, %v389
    %v400 = vpack.c.b16 %v392, %v391
    %409 = vmatprep.subr.bf16.mxu0 0
    %410 = vmatpush1.bf16.msra.mxu0 %v393
    %411 = vmatprep.subr.bf16.mxu0 0
    %412 = vmatpush1.bf16.msra.mxu0 %v394
    %413 = vmatprep.subr.bf16.mxu0 0
    %414 = vmatpush1.bf16.msra.mxu0 %v395
    %415 = vmatprep.subr.bf16.mxu0 0
    %416 = vmatpush1.bf16.msra.mxu0 %v396
    %417 = vmatprep.subr.bf16.mxu0 0
    %418 = vmatpush1.bf16.msra.mxu0 %v397
    %419 = vmatprep.subr.bf16.mxu0 0
    %420 = vmatpush1.bf16.msra.mxu0 %v398
    %421 = vmatprep.subr.bf16.mxu0 0
    %422 = vmatpush1.bf16.msra.mxu0 %v399
    %423 = vmatprep.subr.bf16.mxu0 0
    %424 = vmatpush1.bf16.msra.mxu0 %v400
    %425 = vmatprep.subr.bf16.mxu0 0
    %426 = vmatpush1.bf16.msra.mxu0 0
    %427 = vmatprep.subr.bf16.mxu0 0
    %428 = vmatpush1.bf16.msra.mxu0 0
    %429 = vmatprep.subr.bf16.mxu0 0
    %430 = vmatpush1.bf16.msra.mxu0 0
    %431 = vmatprep.subr.bf16.mxu0 0
    %432 = vmatpush1.bf16.msra.mxu0 0
    %433 = vmatprep.subr.bf16.mxu0 0
    %434 = vmatpush1.bf16.msra.mxu0 0
    %435 = vmatprep.subr.bf16.mxu0 0
    %436 = vmatpush1.bf16.msra.mxu0 0
    %437 = vmatprep.subr.bf16.mxu0 0
    %438 = vmatpush1.bf16.msra.mxu0 0
    %439 = vmatprep.subr.bf16.mxu0 0
    %440 = vmatpush1.bf16.msra.mxu0 0
    %441 = vmatprep.mubr.bf16.mxu0 0
    %442 = vmatmul.mubr.bf16.gmra.mrb[0].mxu0 %v330
    %v443 = vpop.f32.mrb[0].mxu0
    %v444 = vadd.f32 %v359, %v443
    %v445 = vpop.f32.mrb[0].mxu0
    %v446 = vpop.f32.mrb[0].mxu0
    %v447 = vadd.f32 %v359, %v446
    %v448 = vpop.f32.mrb[0].mxu0
    %449 = vmatprep.mubr.bf16.mxu0 0
    %450 = vmatmul.mubr.bf16.gmra.mrb[0].mxu0 %v331
    %v451 = vpop.f32.mrb[0].mxu0
    %v452 = vadd.f32 %v359, %v451
    %v453 = vpop.f32.mrb[0].mxu0
    %v454 = vpop.f32.mrb[0].mxu0
    %v455 = vadd.f32 %v359, %v454
    %v456 = vpop.f32.mrb[0].mxu0
    %457 = vmatprep.mubr.bf16.mxu0 0
    %458 = vmatmul.mubr.bf16.gmra.mrb[0].mxu0 %v332
    %v459 = vpop.f32.mrb[0].mxu0
    %v460 = vadd.f32 %v359, %v459
    %v461 = vpop.f32.mrb[0].mxu0
    %v462 = vpop.f32.mrb[0].mxu0
    %v463 = vadd.f32 %v359, %v462
    %v464 = vpop.f32.mrb[0].mxu0
    %465 = vmatprep.mubr.bf16.mxu0 0
    %466 = vmatmul.mubr.bf16.gmra.mrb[0].mxu0 %v333
    %v467 = vpop.f32.mrb[0].mxu0
    %v468 = vadd.f32 %v359, %v467
    %v469 = vpop.f32.mrb[0].mxu0
    %v470 = vpop.f32.mrb[0].mxu0
    %v471 = vadd.f32 %v359, %v470
    %v472 = vpop.f32.mrb[0].mxu0
    %473 = vmatprep.mubr.bf16.mxu0 0
    %474 = vmatmul.mubr.bf16.gmra.mrb[0].mxu0 %v334
    %v475 = vpop.f32.mrb[0].mxu0
    %v476 = vadd.f32 %v359, %v475
    %v477 = vpop.f32.mrb[0].mxu0
    %v478 = vpop.f32.mrb[0].mxu0
    %v479 = vadd.f32 %v359, %v478
    %v480 = vpop.f32.mrb[0].mxu0
    %481 = vmatprep.mubr.bf16.mxu0 0
    %482 = vmatmul.mubr.bf16.gmra.mrb[0].mxu0 %v335
    %v483 = vpop.f32.mrb[0].mxu0
    %v484 = vadd.f32 %v359, %v483
    %v485 = vpop.f32.mrb[0].mxu0
    %v486 = vpop.f32.mrb[0].mxu0
    %v487 = vadd.f32 %v359, %v486
    %v488 = vpop.f32.mrb[0].mxu0
    %489 = vmatprep.mubr.bf16.mxu0 0
    %490 = vmatmul.mubr.bf16.gmra.mrb[0].mxu0 %v336
    %v491 = vpop.f32.mrb[0].mxu0
    %v492 = vadd.f32 %v359, %v491
    %v493 = vpop.f32.mrb[0].mxu0
    %v494 = vpop.f32.mrb[0].mxu0
    %v495 = vadd.f32 %v359, %v494
    %v496 = vpop.f32.mrb[0].mxu0
    %497 = vmatprep.mubr.bf16.mxu0 0
    %498 = vmatmul.mubr.bf16.gmra.mrb[0].mxu0 %v337
    %v499 = vpop.f32.mrb[0].mxu0
    %v500 = vadd.f32 %v359, %v499
    %v501 = vpop.f32.mrb[0].mxu0
    %v502 = vpop.f32.mrb[0].mxu0
    %v503 = vadd.f32 %v359, %v502
    %v504 = vpop.f32.mrb[0].mxu0
    %505 = vdwg.mxu0
    %v506 = vmax.f32 %v444, 0.0
    %v507 = vmax.f32 %v447, 0.0
    %v508 = vmax.f32 %v452, 0.0
    %v509 = vmax.f32 %v455, 0.0
    %v510 = vmax.f32 %v460, 0.0
    %v511 = vmax.f32 %v463, 0.0
    %v512 = vmax.f32 %v468, 0.0
    %v513 = vmax.f32 %v471, 0.0
    %v514 = vmax.f32 %v476, 0.0
    %v515 = vmax.f32 %v479, 0.0
    %v516 = vmax.f32 %v484, 0.0
    %v517 = vmax.f32 %v487, 0.0
    %v518 = vmax.f32 %v492, 0.0
    %v519 = vmax.f32 %v495, 0.0
    %v520 = vmax.f32 %v500, 0.0
    %v521 = vmax.f32 %v503, 0.0
    %v522 = vpack.c.bf16 %v507, %v506
    %v523 = vpack.c.bf16 %v509, %v508
    %v524 = vpack.c.bf16 %v511, %v510
    %v525 = vpack.c.bf16 %v513, %v512
    %v526 = vpack.c.bf16 %v515, %v514
    %v527 = vpack.c.bf16 %v517, %v516
    %v528 = vpack.c.bf16 %v519, %v518
    %v529 = vpack.c.bf16 %v521, %v520
    %v538 = vunpack.c.l.b16 %v522
    %v539 = vunpack.c.h.b16 %v522
    %v540 = vunpack.c.l.b16 %v523
    %v541 = vunpack.c.h.b16 %v523
    %v542 = vunpack.c.l.b16 %v524
    %v543 = vunpack.c.h.b16 %v524
    %v544 = vunpack.c.l.b16 %v525
    %v545 = vunpack.c.h.b16 %v525
    %v546 = vunpack.c.l.b16 %v526
    %v547 = vunpack.c.h.b16 %v526
    %v548 = vunpack.c.l.b16 %v527
    %v549 = vunpack.c.h.b16 %v527
    %v550 = vunpack.c.l.b16 %v528
    %v551 = vunpack.c.h.b16 %v528
    %v552 = vunpack.c.l.b16 %v529
    %v553 = vunpack.c.h.b16 %v529
    %v554 = vpack.c.b16 %v538, %v538
    %v555 = vpack.c.b16 %v539, %v539
    %v556 = vpack.c.b16 %v540, %v540
    %v557 = vpack.c.b16 %v541, %v541
    %v558 = vpack.c.b16 %v542, %v542
    %v559 = vpack.c.b16 %v543, %v543
    %v560 = vpack.c.b16 %v544, %v544
    %v561 = vpack.c.b16 %v545, %v545
    %v562 = vpack.c.b16 %v546, %v546
    %v563 = vpack.c.b16 %v547, %v547
    %v564 = vpack.c.b16 %v548, %v548
    %v565 = vpack.c.b16 %v549, %v549
    %v566 = vpack.c.b16 %v550, %v550
    %v567 = vpack.c.b16 %v551, %v551
    %v568 = vpack.c.b16 %v552, %v552
    %v569 = vpack.c.b16 %v553, %v553
    %586 = vst [vmem:[%s4] sm:$0xf] %v554
    %587 = vst [vmem:[%s4 + $0x4] sm:$0xf] %v555
    %588 = vst [vmem:[%s4 + $0x8] sm:$0xf] %v556
    %589 = vst [vmem:[%s4 + $0xc] sm:$0xf] %v557
    %590 = vst [vmem:[%s4 + $0x10] sm:$0xf] %v558
    %591 = vst [vmem:[%s4 + $0x14] sm:$0xf] %v559
    %592 = vst [vmem:[%s4 + $0x18] sm:$0xf] %v560
    %593 = vst [vmem:[%s4 + $0x1c] sm:$0xf] %v561
    %594 = vst [vmem:[%s4 + $0x20] sm:$0xf] %v562
    %595 = vst [vmem:[%s4 + $0x24] sm:$0xf] %v563
    %596 = vst [vmem:[%s4 + $0x28] sm:$0xf] %v564
    %597 = vst [vmem:[%s4 + $0x2c] sm:$0xf] %v565
    %598 = vst [vmem:[%s4 + $0x30] sm:$0xf] %v566
    %599 = vst [vmem:[%s4 + $0x34] sm:$0xf] %v567
    %600 = vst [vmem:[%s4 + $0x38] sm:$0xf] %v568
    %601 = vst [vmem:[%s4 + $0x3c] sm:$0xf] %v569
  $region25: #{gcn_forward.3} parent=0 // pred_fallthru
    _
  // Predicated region
  $region26: #{gcn_forward.3} parent=0 // pred_check
    _
  $region27: #{gcn_forward.3} parent=0 // pred_check_branch
    %603 = sbr.rel (0) target = $region29
  $region28: #{gcn_forward.3} parent=0 // pred_region
    _
  $region29: #{gcn_forward.3} parent=0 // pred_fallthru
    _
  // Predicated region
  $region30: #{gcn_forward.3} parent=0 // pred_check
    _
  $region31: #{gcn_forward.3} parent=0 // pred_check_branch
    %605 = sbr.rel (0) target = $region33
  $region32: #{gcn_forward.3} parent=0 // pred_region
    _
  $region33: #{gcn_forward.3} parent=0 // pred_fallthru
    _

// kernel: gcn_forward.5
$region0: #{gcn_forward.5}
  #allocation0 [shape = 'u32[]', space=smem, size = 0x4, offset = 0x4, fixed_abs, tag = 'smem constant byte address 0x4 - core index']
  #allocation1 [shape = 'u32[144,128]{1,0:T(1,128)}', space=vmem, size = 0x12000, scoped, tag = 'internal scratch']
  #allocation2 [shape = 'f32[128,128]{1,0:T(8,128)}', space=vmem, size = 0x10000, scoped, tag = 'scratch operand']
  %s0 = inlined_call_operand.vmem [shape: bf16[128,128], index: 0, kind: input, shape index: {}]
  %s1 = inlined_call_operand.vmem [shape: bf16[128,128], index: 1, kind: input, shape index: {}]
  %s2 = inlined_call_operand.vmem [shape: bf16[128,128], index: 2, kind: input, shape index: {}]
  %s3 = inlined_call_operand.vmem [shape: f32[1,128], index: 3, kind: input, shape index: {}]
  %s4 = inlined_call_operand.vmem [shape: f32[128,128], index: 4, kind: output, shape index: {}]
  %s5 = sld [smem:[#allocation0]]
  $region34: #{gcn_forward.5} parent=0
    _
  %s7 = ssub.s32 1, %s5
  %s8 = scalar_select 0, %s7, %s5
  // Predicated region
  $region2: #{gcn_forward.5} parent=0 // pred_check
    _
  $region3: #{gcn_forward.5} parent=0 // pred_check_branch
    %10 = sbr.rel (0) target = $region5
  $region4: #{gcn_forward.5} parent=0 // pred_region
    _
  $region5: #{gcn_forward.5} parent=0 // pred_fallthru
    _
  // Predicated region
  $region6: #{gcn_forward.5} parent=0 // pred_check
    _
  $region7: #{gcn_forward.5} parent=0 // pred_check_branch
    %12 = sbr.rel (0) target = $region9
  $region8: #{gcn_forward.5} parent=0 // pred_region
    _
  $region9: #{gcn_forward.5} parent=0 // pred_fallthru
    _
  // Predicated region
  $region10: #{gcn_forward.5} parent=0 // pred_check
    _
  $region11: #{gcn_forward.5} parent=0 // pred_check_branch
    %14 = sbr.rel (0) target = $region13
  $region12: #{gcn_forward.5} parent=0 // pred_region
    _
  $region13: #{gcn_forward.5} parent=0 // pred_fallthru
    _
  // Predicated region
  $region14: #{gcn_forward.5} parent=0 // pred_check
    _
  $region15: #{gcn_forward.5} parent=0 // pred_check_branch
    %16 = sbr.rel (0) target = $region17
  $region16: #{gcn_forward.5} parent=0 // pred_region
    _
  $region17: #{gcn_forward.5} parent=0 // pred_fallthru
    _
  %p18 = scmp.eq.s32.totalorder 0, 0
  // Predicated region
  $region18: #{gcn_forward.5} parent=0 // pred_check
    %p19 = pneg %p18
  $region19: #{gcn_forward.5} parent=0 // pred_check_branch
    %21 = sbr.rel (%p19) target = $region21
  $region20: #{gcn_forward.5} parent=0 // pred_region
    %22 = vst [vmem:[#allocation2] sm:$0xff] 0.0
    %23 = vst [vmem:[#allocation2 + $0x8] sm:$0xff] 0.0
    %24 = vst [vmem:[#allocation2 + $0x10] sm:$0xff] 0.0
    %25 = vst [vmem:[#allocation2 + $0x18] sm:$0xff] 0.0
    %26 = vst [vmem:[#allocation2 + $0x20] sm:$0xff] 0.0
    %27 = vst [vmem:[#allocation2 + $0x28] sm:$0xff] 0.0
    %28 = vst [vmem:[#allocation2 + $0x30] sm:$0xff] 0.0
    %29 = vst [vmem:[#allocation2 + $0x38] sm:$0xff] 0.0
    %30 = vst [vmem:[#allocation2 + $0x40] sm:$0xff] 0.0
    %31 = vst [vmem:[#allocation2 + $0x48] sm:$0xff] 0.0
    %32 = vst [vmem:[#allocation2 + $0x50] sm:$0xff] 0.0
    %33 = vst [vmem:[#allocation2 + $0x58] sm:$0xff] 0.0
    %34 = vst [vmem:[#allocation2 + $0x60] sm:$0xff] 0.0
    %35 = vst [vmem:[#allocation2 + $0x68] sm:$0xff] 0.0
    %36 = vst [vmem:[#allocation2 + $0x70] sm:$0xff] 0.0
    %37 = vst [vmem:[#allocation2 + $0x78] sm:$0xff] 0.0
  $region21: #{gcn_forward.5} parent=0 // pred_fallthru
    _
  %v38 = vld [vmem:[#allocation2] sm:$0xff]
  %v39 = vld [vmem:[#allocation2 + $0x8] sm:$0xff]
  %v40 = vld [vmem:[#allocation2 + $0x10] sm:$0xff]
  %v41 = vld [vmem:[#allocation2 + $0x18] sm:$0xff]
  %v42 = vld [vmem:[#allocation2 + $0x20] sm:$0xff]
  %v43 = vld [vmem:[#allocation2 + $0x28] sm:$0xff]
  %v44 = vld [vmem:[#allocation2 + $0x30] sm:$0xff]
  %v45 = vld [vmem:[#allocation2 + $0x38] sm:$0xff]
  %v46 = vld [vmem:[#allocation2 + $0x40] sm:$0xff]
  %v47 = vld [vmem:[#allocation2 + $0x48] sm:$0xff]
  %v48 = vld [vmem:[#allocation2 + $0x50] sm:$0xff]
  %v49 = vld [vmem:[#allocation2 + $0x58] sm:$0xff]
  %v50 = vld [vmem:[#allocation2 + $0x60] sm:$0xff]
  %v51 = vld [vmem:[#allocation2 + $0x68] sm:$0xff]
  %v52 = vld [vmem:[#allocation2 + $0x70] sm:$0xff]
  %v53 = vld [vmem:[#allocation2 + $0x78] sm:$0xff]
  %v54 = vld [vmem:[%s0] sm:$0xf]
  %v55 = vld [vmem:[%s0 + $0x4] sm:$0xf]
  %v56 = vld [vmem:[%s0 + $0x8] sm:$0xf]
  %v57 = vld [vmem:[%s0 + $0xc] sm:$0xf]
  %v58 = vld [vmem:[%s0 + $0x10] sm:$0xf]
  %v59 = vld [vmem:[%s0 + $0x14] sm:$0xf]
  %v60 = vld [vmem:[%s0 + $0x18] sm:$0xf]
  %v61 = vld [vmem:[%s0 + $0x1c] sm:$0xf]
  %v62 = vld [vmem:[%s0 + $0x20] sm:$0xf]
  %v63 = vld [vmem:[%s0 + $0x24] sm:$0xf]
  %v64 = vld [vmem:[%s0 + $0x28] sm:$0xf]
  %v65 = vld [vmem:[%s0 + $0x2c] sm:$0xf]
  %v66 = vld [vmem:[%s0 + $0x30] sm:$0xf]
  %v67 = vld [vmem:[%s0 + $0x34] sm:$0xf]
  %v68 = vld [vmem:[%s0 + $0x38] sm:$0xf]
  %v69 = vld [vmem:[%s0 + $0x3c] sm:$0xf]
  %v70 = vld [vmem:[%s1] sm:$0xf]
  %v71 = vld [vmem:[%s1 + $0x4] sm:$0xf]
  %v72 = vld [vmem:[%s1 + $0x8] sm:$0xf]
  %v73 = vld [vmem:[%s1 + $0xc] sm:$0xf]
  %v74 = vld [vmem:[%s1 + $0x10] sm:$0xf]
  %v75 = vld [vmem:[%s1 + $0x14] sm:$0xf]
  %v76 = vld [vmem:[%s1 + $0x18] sm:$0xf]
  %v77 = vld [vmem:[%s1 + $0x1c] sm:$0xf]
  %v78 = vld [vmem:[%s1 + $0x20] sm:$0xf]
  %v79 = vld [vmem:[%s1 + $0x24] sm:$0xf]
  %v80 = vld [vmem:[%s1 + $0x28] sm:$0xf]
  %v81 = vld [vmem:[%s1 + $0x2c] sm:$0xf]
  %v82 = vld [vmem:[%s1 + $0x30] sm:$0xf]
  %v83 = vld [vmem:[%s1 + $0x34] sm:$0xf]
  %v84 = vld [vmem:[%s1 + $0x38] sm:$0xf]
  %v85 = vld [vmem:[%s1 + $0x3c] sm:$0xf]
  %v102 = vunpack.c.l.b16 %v54
  %v103 = vunpack.c.l.b16 %v55
  %v104 = vunpack.c.l.b16 %v56
  %v105 = vunpack.c.l.b16 %v57
  %v106 = vunpack.c.l.b16 %v58
  %v107 = vunpack.c.l.b16 %v59
  %v108 = vunpack.c.l.b16 %v60
  %v109 = vunpack.c.l.b16 %v61
  %v110 = vunpack.c.l.b16 %v62
  %v111 = vunpack.c.l.b16 %v63
  %v112 = vunpack.c.l.b16 %v64
  %v113 = vunpack.c.l.b16 %v65
  %v114 = vunpack.c.l.b16 %v66
  %v115 = vunpack.c.l.b16 %v67
  %v116 = vunpack.c.l.b16 %v68
  %v117 = vunpack.c.l.b16 %v69
  %v118 = vpack.c.b16 %v103, %v102
  %v119 = vpack.c.b16 %v105, %v104
  %v120 = vpack.c.b16 %v107, %v106
  %v121 = vpack.c.b16 %v109, %v108
  %v122 = vpack.c.b16 %v111, %v110
  %v123 = vpack.c.b16 %v113, %v112
  %v124 = vpack.c.b16 %v115, %v114
  %v125 = vpack.c.b16 %v117, %v116
  %v150 = vunpack.c.l.b16 %v70
  %v151 = vunpack.c.l.b16 %v71
  %v152 = vunpack.c.l.b16 %v72
  %v153 = vunpack.c.l.b16 %v73
  %v154 = vunpack.c.l.b16 %v74
  %v155 = vunpack.c.l.b16 %v75
  %v156 = vunpack.c.l.b16 %v76
  %v157 = vunpack.c.l.b16 %v77
  %v158 = vunpack.c.l.b16 %v78
  %v159 = vunpack.c.l.b16 %v79
  %v160 = vunpack.c.l.b16 %v80
  %v161 = vunpack.c.l.b16 %v81
  %v162 = vunpack.c.l.b16 %v82
  %v163 = vunpack.c.l.b16 %v83
  %v164 = vunpack.c.l.b16 %v84
  %v165 = vunpack.c.l.b16 %v85
  %v166 = vpack.c.b16 %v151, %v150
  %v167 = vpack.c.b16 %v153, %v152
  %v168 = vpack.c.b16 %v155, %v154
  %v169 = vpack.c.b16 %v157, %v156
  %v170 = vpack.c.b16 %v159, %v158
  %v171 = vpack.c.b16 %v161, %v160
  %v172 = vpack.c.b16 %v163, %v162
  %v173 = vpack.c.b16 %v165, %v164
  %182 = vmatprep.subr.bf16.mxu0 0
  %183 = vmatpush1.bf16.msra.mxu0 %v166
  %184 = vmatprep.subr.bf16.mxu0 0
  %185 = vmatpush1.bf16.msra.mxu0 %v167
  %186 = vmatprep.subr.bf16.mxu0 0
  %187 = vmatpush1.bf16.msra.mxu0 %v168
  %188 = vmatprep.subr.bf16.mxu0 0
  %189 = vmatpush1.bf16.msra.mxu0 %v169
  %190 = vmatprep.subr.bf16.mxu0 0
  %191 = vmatpush1.bf16.msra.mxu0 %v170
  %192 = vmatprep.subr.bf16.mxu0 0
  %193 = vmatpush1.bf16.msra.mxu0 %v171
  %194 = vmatprep.subr.bf16.mxu0 0
  %195 = vmatpush1.bf16.msra.mxu0 %v172
  %196 = vmatprep.subr.bf16.mxu0 0
  %197 = vmatpush1.bf16.msra.mxu0 %v173
  %198 = vmatprep.subr.bf16.mxu0 0
  %199 = vmatpush1.bf16.msra.mxu0 0
  %200 = vmatprep.subr.bf16.mxu0 0
  %201 = vmatpush1.bf16.msra.mxu0 0
  %202 = vmatprep.subr.bf16.mxu0 0
  %203 = vmatpush1.bf16.msra.mxu0 0
  %204 = vmatprep.subr.bf16.mxu0 0
  %205 = vmatpush1.bf16.msra.mxu0 0
  %206 = vmatprep.subr.bf16.mxu0 0
  %207 = vmatpush1.bf16.msra.mxu0 0
  %208 = vmatprep.subr.bf16.mxu0 0
  %209 = vmatpush1.bf16.msra.mxu0 0
  %210 = vmatprep.subr.bf16.mxu0 0
  %211 = vmatpush1.bf16.msra.mxu0 0
  %212 = vmatprep.subr.bf16.mxu0 0
  %213 = vmatpush1.bf16.msra.mxu0 0
  %214 = vmatprep.mubr.bf16.mxu0 0
  %215 = vmatmul.mubr.bf16.gmra.mrb[0].mxu0 %v118
  %v216 = vpop.f32.mrb[0].mxu0
  %v217 = vadd.f32 0.0, %v216
  %v218 = vpop.f32.mrb[0].mxu0
  %v219 = vpop.f32.mrb[0].mxu0
  %v220 = vadd.f32 0.0, %v219
  %v221 = vpop.f32.mrb[0].mxu0
  %222 = vmatprep.mubr.bf16.mxu0 0
  %223 = vmatmul.mubr.bf16.gmra.mrb[0].mxu0 %v119
  %v224 = vpop.f32.mrb[0].mxu0
  %v225 = vadd.f32 0.0, %v224
  %v226 = vpop.f32.mrb[0].mxu0
  %v227 = vpop.f32.mrb[0].mxu0
  %v228 = vadd.f32 0.0, %v227
  %v229 = vpop.f32.mrb[0].mxu0
  %230 = vmatprep.mubr.bf16.mxu0 0
  %231 = vmatmul.mubr.bf16.gmra.mrb[0].mxu0 %v120
  %v232 = vpop.f32.mrb[0].mxu0
  %v233 = vadd.f32 0.0, %v232
  %v234 = vpop.f32.mrb[0].mxu0
  %v235 = vpop.f32.mrb[0].mxu0
  %v236 = vadd.f32 0.0, %v235
  %v237 = vpop.f32.mrb[0].mxu0
  %238 = vmatprep.mubr.bf16.mxu0 0
  %239 = vmatmul.mubr.bf16.gmra.mrb[0].mxu0 %v121
  %v240 = vpop.f32.mrb[0].mxu0
  %v241 = vadd.f32 0.0, %v240
  %v242 = vpop.f32.mrb[0].mxu0
  %v243 = vpop.f32.mrb[0].mxu0
  %v244 = vadd.f32 0.0, %v243
  %v245 = vpop.f32.mrb[0].mxu0
  %246 = vmatprep.mubr.bf16.mxu0 0
  %247 = vmatmul.mubr.bf16.gmra.mrb[0].mxu0 %v122
  %v248 = vpop.f32.mrb[0].mxu0
  %v249 = vadd.f32 0.0, %v248
  %v250 = vpop.f32.mrb[0].mxu0
  %v251 = vpop.f32.mrb[0].mxu0
  %v252 = vadd.f32 0.0, %v251
  %v253 = vpop.f32.mrb[0].mxu0
  %254 = vmatprep.mubr.bf16.mxu0 0
  %255 = vmatmul.mubr.bf16.gmra.mrb[0].mxu0 %v123
  %v256 = vpop.f32.mrb[0].mxu0
  %v257 = vadd.f32 0.0, %v256
  %v258 = vpop.f32.mrb[0].mxu0
  %v259 = vpop.f32.mrb[0].mxu0
  %v260 = vadd.f32 0.0, %v259
  %v261 = vpop.f32.mrb[0].mxu0
  %262 = vmatprep.mubr.bf16.mxu0 0
  %263 = vmatmul.mubr.bf16.gmra.mrb[0].mxu0 %v124
  %v264 = vpop.f32.mrb[0].mxu0
  %v265 = vadd.f32 0.0, %v264
  %v266 = vpop.f32.mrb[0].mxu0
  %v267 = vpop.f32.mrb[0].mxu0
  %v268 = vadd.f32 0.0, %v267
  %v269 = vpop.f32.mrb[0].mxu0
  %270 = vmatprep.mubr.bf16.mxu0 0
  %271 = vmatmul.mubr.bf16.gmra.mrb[0].mxu0 %v125
  %v272 = vpop.f32.mrb[0].mxu0
  %v273 = vadd.f32 0.0, %v272
  %v274 = vpop.f32.mrb[0].mxu0
  %v275 = vpop.f32.mrb[0].mxu0
  %v276 = vadd.f32 0.0, %v275
  %v277 = vpop.f32.mrb[0].mxu0
  %278 = vdwg.mxu0
  %v279 = vadd.f32 %v38, %v217
  %v280 = vadd.f32 %v39, %v220
  %v281 = vadd.f32 %v40, %v225
  %v282 = vadd.f32 %v41, %v228
  %v283 = vadd.f32 %v42, %v233
  %v284 = vadd.f32 %v43, %v236
  %v285 = vadd.f32 %v44, %v241
  %v286 = vadd.f32 %v45, %v244
  %v287 = vadd.f32 %v46, %v249
  %v288 = vadd.f32 %v47, %v252
  %v289 = vadd.f32 %v48, %v257
  %v290 = vadd.f32 %v49, %v260
  %v291 = vadd.f32 %v50, %v265
  %v292 = vadd.f32 %v51, %v268
  %v293 = vadd.f32 %v52, %v273
  %v294 = vadd.f32 %v53, %v276
  %295 = vst [vmem:[#allocation2] sm:$0xff] %v279
  %296 = vst [vmem:[#allocation2 + $0x8] sm:$0xff] %v280
  %297 = vst [vmem:[#allocation2 + $0x10] sm:$0xff] %v281
  %298 = vst [vmem:[#allocation2 + $0x18] sm:$0xff] %v282
  %299 = vst [vmem:[#allocation2 + $0x20] sm:$0xff] %v283
  %300 = vst [vmem:[#allocation2 + $0x28] sm:$0xff] %v284
  %301 = vst [vmem:[#allocation2 + $0x30] sm:$0xff] %v285
  %302 = vst [vmem:[#allocation2 + $0x38] sm:$0xff] %v286
  %303 = vst [vmem:[#allocation2 + $0x40] sm:$0xff] %v287
  %304 = vst [vmem:[#allocation2 + $0x48] sm:$0xff] %v288
  %305 = vst [vmem:[#allocation2 + $0x50] sm:$0xff] %v289
  %306 = vst [vmem:[#allocation2 + $0x58] sm:$0xff] %v290
  %307 = vst [vmem:[#allocation2 + $0x60] sm:$0xff] %v291
  %308 = vst [vmem:[#allocation2 + $0x68] sm:$0xff] %v292
  %309 = vst [vmem:[#allocation2 + $0x70] sm:$0xff] %v293
  %310 = vst [vmem:[#allocation2 + $0x78] sm:$0xff] %v294
  // Predicated region
  $region22: #{gcn_forward.5} parent=0 // pred_check
    %p311 = pneg %p18
  $region23: #{gcn_forward.5} parent=0 // pred_check_branch
    %313 = sbr.rel (%p311) target = $region25
  $region24: #{gcn_forward.5} parent=0 // pred_region
    %v314 = vld [vmem:[#allocation2] sm:$0xff]
    %v315 = vld [vmem:[#allocation2 + $0x8] sm:$0xff]
    %v316 = vld [vmem:[#allocation2 + $0x10] sm:$0xff]
    %v317 = vld [vmem:[#allocation2 + $0x18] sm:$0xff]
    %v318 = vld [vmem:[#allocation2 + $0x20] sm:$0xff]
    %v319 = vld [vmem:[#allocation2 + $0x28] sm:$0xff]
    %v320 = vld [vmem:[#allocation2 + $0x30] sm:$0xff]
    %v321 = vld [vmem:[#allocation2 + $0x38] sm:$0xff]
    %v322 = vld [vmem:[#allocation2 + $0x40] sm:$0xff]
    %v323 = vld [vmem:[#allocation2 + $0x48] sm:$0xff]
    %v324 = vld [vmem:[#allocation2 + $0x50] sm:$0xff]
    %v325 = vld [vmem:[#allocation2 + $0x58] sm:$0xff]
    %v326 = vld [vmem:[#allocation2 + $0x60] sm:$0xff]
    %v327 = vld [vmem:[#allocation2 + $0x68] sm:$0xff]
    %v328 = vld [vmem:[#allocation2 + $0x70] sm:$0xff]
    %v329 = vld [vmem:[#allocation2 + $0x78] sm:$0xff]
    %v330 = vpack.c.bf16 %v315, %v314
    %v331 = vpack.c.bf16 %v317, %v316
    %v332 = vpack.c.bf16 %v319, %v318
    %v333 = vpack.c.bf16 %v321, %v320
    %v334 = vpack.c.bf16 %v323, %v322
    %v335 = vpack.c.bf16 %v325, %v324
    %v336 = vpack.c.bf16 %v327, %v326
    %v337 = vpack.c.bf16 %v329, %v328
    %v338 = vld [vmem:[%s2] sm:$0xf]
    %v339 = vld [vmem:[%s2 + $0x4] sm:$0xf]
    %v340 = vld [vmem:[%s2 + $0x8] sm:$0xf]
    %v341 = vld [vmem:[%s2 + $0xc] sm:$0xf]
    %v342 = vld [vmem:[%s2 + $0x10] sm:$0xf]
    %v343 = vld [vmem:[%s2 + $0x14] sm:$0xf]
    %v344 = vld [vmem:[%s2 + $0x18] sm:$0xf]
    %v345 = vld [vmem:[%s2 + $0x1c] sm:$0xf]
    %v346 = vld [vmem:[%s2 + $0x20] sm:$0xf]
    %v347 = vld [vmem:[%s2 + $0x24] sm:$0xf]
    %v348 = vld [vmem:[%s2 + $0x28] sm:$0xf]
    %v349 = vld [vmem:[%s2 + $0x2c] sm:$0xf]
    %v350 = vld [vmem:[%s2 + $0x30] sm:$0xf]
    %v351 = vld [vmem:[%s2 + $0x34] sm:$0xf]
    %v352 = vld [vmem:[%s2 + $0x38] sm:$0xf]
    %v353 = vld [vmem:[%s2 + $0x3c] sm:$0xf]
    %v354 = vld [vmem:[%s3] sm:$0x1]
    %v356 = vlaneseq
    %v357 = vshrl.u32 %v356, 7
    %v358 = vsub.s32 0, %v357
    %v359 = vrot.slane %v354, %v358
    %v377 = vunpack.c.l.b16 %v338
    %v378 = vunpack.c.l.b16 %v339
    %v379 = vunpack.c.l.b16 %v340
    %v380 = vunpack.c.l.b16 %v341
    %v381 = vunpack.c.l.b16 %v342
    %v382 = vunpack.c.l.b16 %v343
    %v383 = vunpack.c.l.b16 %v344
    %v384 = vunpack.c.l.b16 %v345
    %v385 = vunpack.c.l.b16 %v346
    %v386 = vunpack.c.l.b16 %v347
    %v387 = vunpack.c.l.b16 %v348
    %v388 = vunpack.c.l.b16 %v349
    %v389 = vunpack.c.l.b16 %v350
    %v390 = vunpack.c.l.b16 %v351
    %v391 = vunpack.c.l.b16 %v352
    %v392 = vunpack.c.l.b16 %v353
    %v393 = vpack.c.b16 %v378, %v377
    %v394 = vpack.c.b16 %v380, %v379
    %v395 = vpack.c.b16 %v382, %v381
    %v396 = vpack.c.b16 %v384, %v383
    %v397 = vpack.c.b16 %v386, %v385
    %v398 = vpack.c.b16 %v388, %v387
    %v399 = vpack.c.b16 %v390, %v389
    %v400 = vpack.c.b16 %v392, %v391
    %409 = vmatprep.subr.bf16.mxu0 0
    %410 = vmatpush1.bf16.msra.mxu0 %v393
    %411 = vmatprep.subr.bf16.mxu0 0
    %412 = vmatpush1.bf16.msra.mxu0 %v394
    %413 = vmatprep.subr.bf16.mxu0 0
    %414 = vmatpush1.bf16.msra.mxu0 %v395
    %415 = vmatprep.subr.bf16.mxu0 0
    %416 = vmatpush1.bf16.msra.mxu0 %v396
    %417 = vmatprep.subr.bf16.mxu0 0
    %418 = vmatpush1.bf16.msra.mxu0 %v397
    %419 = vmatprep.subr.bf16.mxu0 0
    %420 = vmatpush1.bf16.msra.mxu0 %v398
    %421 = vmatprep.subr.bf16.mxu0 0
    %422 = vmatpush1.bf16.msra.mxu0 %v399
    %423 = vmatprep.subr.bf16.mxu0 0
    %424 = vmatpush1.bf16.msra.mxu0 %v400
    %425 = vmatprep.subr.bf16.mxu0 0
    %426 = vmatpush1.bf16.msra.mxu0 0
    %427 = vmatprep.subr.bf16.mxu0 0
    %428 = vmatpush1.bf16.msra.mxu0 0
    %429 = vmatprep.subr.bf16.mxu0 0
    %430 = vmatpush1.bf16.msra.mxu0 0
    %431 = vmatprep.subr.bf16.mxu0 0
    %432 = vmatpush1.bf16.msra.mxu0 0
    %433 = vmatprep.subr.bf16.mxu0 0
    %434 = vmatpush1.bf16.msra.mxu0 0
    %435 = vmatprep.subr.bf16.mxu0 0
    %436 = vmatpush1.bf16.msra.mxu0 0
    %437 = vmatprep.subr.bf16.mxu0 0
    %438 = vmatpush1.bf16.msra.mxu0 0
    %439 = vmatprep.subr.bf16.mxu0 0
    %440 = vmatpush1.bf16.msra.mxu0 0
    %441 = vmatprep.mubr.bf16.mxu0 0
    %442 = vmatmul.mubr.bf16.gmra.mrb[0].mxu0 %v330
    %v443 = vpop.f32.mrb[0].mxu0
    %v444 = vadd.f32 %v359, %v443
    %v445 = vpop.f32.mrb[0].mxu0
    %v446 = vpop.f32.mrb[0].mxu0
    %v447 = vadd.f32 %v359, %v446
    %v448 = vpop.f32.mrb[0].mxu0
    %449 = vmatprep.mubr.bf16.mxu0 0
    %450 = vmatmul.mubr.bf16.gmra.mrb[0].mxu0 %v331
    %v451 = vpop.f32.mrb[0].mxu0
    %v452 = vadd.f32 %v359, %v451
    %v453 = vpop.f32.mrb[0].mxu0
    %v454 = vpop.f32.mrb[0].mxu0
    %v455 = vadd.f32 %v359, %v454
    %v456 = vpop.f32.mrb[0].mxu0
    %457 = vmatprep.mubr.bf16.mxu0 0
    %458 = vmatmul.mubr.bf16.gmra.mrb[0].mxu0 %v332
    %v459 = vpop.f32.mrb[0].mxu0
    %v460 = vadd.f32 %v359, %v459
    %v461 = vpop.f32.mrb[0].mxu0
    %v462 = vpop.f32.mrb[0].mxu0
    %v463 = vadd.f32 %v359, %v462
    %v464 = vpop.f32.mrb[0].mxu0
    %465 = vmatprep.mubr.bf16.mxu0 0
    %466 = vmatmul.mubr.bf16.gmra.mrb[0].mxu0 %v333
    %v467 = vpop.f32.mrb[0].mxu0
    %v468 = vadd.f32 %v359, %v467
    %v469 = vpop.f32.mrb[0].mxu0
    %v470 = vpop.f32.mrb[0].mxu0
    %v471 = vadd.f32 %v359, %v470
    %v472 = vpop.f32.mrb[0].mxu0
    %473 = vmatprep.mubr.bf16.mxu0 0
    %474 = vmatmul.mubr.bf16.gmra.mrb[0].mxu0 %v334
    %v475 = vpop.f32.mrb[0].mxu0
    %v476 = vadd.f32 %v359, %v475
    %v477 = vpop.f32.mrb[0].mxu0
    %v478 = vpop.f32.mrb[0].mxu0
    %v479 = vadd.f32 %v359, %v478
    %v480 = vpop.f32.mrb[0].mxu0
    %481 = vmatprep.mubr.bf16.mxu0 0
    %482 = vmatmul.mubr.bf16.gmra.mrb[0].mxu0 %v335
    %v483 = vpop.f32.mrb[0].mxu0
    %v484 = vadd.f32 %v359, %v483
    %v485 = vpop.f32.mrb[0].mxu0
    %v486 = vpop.f32.mrb[0].mxu0
    %v487 = vadd.f32 %v359, %v486
    %v488 = vpop.f32.mrb[0].mxu0
    %489 = vmatprep.mubr.bf16.mxu0 0
    %490 = vmatmul.mubr.bf16.gmra.mrb[0].mxu0 %v336
    %v491 = vpop.f32.mrb[0].mxu0
    %v492 = vadd.f32 %v359, %v491
    %v493 = vpop.f32.mrb[0].mxu0
    %v494 = vpop.f32.mrb[0].mxu0
    %v495 = vadd.f32 %v359, %v494
    %v496 = vpop.f32.mrb[0].mxu0
    %497 = vmatprep.mubr.bf16.mxu0 0
    %498 = vmatmul.mubr.bf16.gmra.mrb[0].mxu0 %v337
    %v499 = vpop.f32.mrb[0].mxu0
    %v500 = vadd.f32 %v359, %v499
    %v501 = vpop.f32.mrb[0].mxu0
    %v502 = vpop.f32.mrb[0].mxu0
    %v503 = vadd.f32 %v359, %v502
    %v504 = vpop.f32.mrb[0].mxu0
    %505 = vdwg.mxu0
    %v506 = vlaneseq
    %v507 = vand.u32 %v506, 127
    %vm508 = vcmp.lt.s32.totalorder %v507, 4
    %v509 = vsel %vm508, %v444, -inf
    %v510 = vsel %vm508, %v447, -inf
    %v511 = vsel %vm508, %v452, -inf
    %v512 = vsel %vm508, %v455, -inf
    %v513 = vsel %vm508, %v460, -inf
    %v514 = vsel %vm508, %v463, -inf
    %v515 = vsel %vm508, %v468, -inf
    %v516 = vsel %vm508, %v471, -inf
    %v517 = vsel %vm508, %v476, -inf
    %v518 = vsel %vm508, %v479, -inf
    %v519 = vsel %vm508, %v484, -inf
    %v520 = vsel %vm508, %v487, -inf
    %v521 = vsel %vm508, %v492, -inf
    %v522 = vsel %vm508, %v495, -inf
    %v523 = vsel %vm508, %v500, -inf
    %v524 = vsel %vm508, %v503, -inf
    %525 = vmax.xlane.f32.xlu0 %v509
    %v526 = vpop.xlane.xlu0 %525
    %527 = vmax.xlane.f32.xlu0 %v510
    %v528 = vpop.xlane.xlu0 %527
    %529 = vmax.xlane.f32.xlu0 %v511
    %v530 = vpop.xlane.xlu0 %529
    %531 = vmax.xlane.f32.xlu0 %v512
    %v532 = vpop.xlane.xlu0 %531
    %533 = vmax.xlane.f32.xlu0 %v513
    %v534 = vpop.xlane.xlu0 %533
    %535 = vmax.xlane.f32.xlu0 %v514
    %v536 = vpop.xlane.xlu0 %535
    %537 = vmax.xlane.f32.xlu0 %v515
    %v538 = vpop.xlane.xlu0 %537
    %539 = vmax.xlane.f32.xlu0 %v516
    %v540 = vpop.xlane.xlu0 %539
    %541 = vmax.xlane.f32.xlu0 %v517
    %v542 = vpop.xlane.xlu0 %541
    %543 = vmax.xlane.f32.xlu0 %v518
    %v544 = vpop.xlane.xlu0 %543
    %545 = vmax.xlane.f32.xlu0 %v519
    %v546 = vpop.xlane.xlu0 %545
    %547 = vmax.xlane.f32.xlu0 %v520
    %v548 = vpop.xlane.xlu0 %547
    %549 = vmax.xlane.f32.xlu0 %v521
    %v550 = vpop.xlane.xlu0 %549
    %551 = vmax.xlane.f32.xlu0 %v522
    %v552 = vpop.xlane.xlu0 %551
    %553 = vmax.xlane.f32.xlu0 %v523
    %v554 = vpop.xlane.xlu0 %553
    %555 = vmax.xlane.f32.xlu0 %v524
    %v556 = vpop.xlane.xlu0 %555
    %v557 = vsub.f32 %v509, %v526
    %v558 = vsub.f32 %v510, %v528
    %v559 = vsub.f32 %v511, %v530
    %v560 = vsub.f32 %v512, %v532
    %v561 = vsub.f32 %v513, %v534
    %v562 = vsub.f32 %v514, %v536
    %v563 = vsub.f32 %v515, %v538
    %v564 = vsub.f32 %v516, %v540
    %v565 = vsub.f32 %v517, %v542
    %v566 = vsub.f32 %v518, %v544
    %v567 = vsub.f32 %v519, %v546
    %v568 = vsub.f32 %v520, %v548
    %v569 = vsub.f32 %v521, %v550
    %v570 = vsub.f32 %v522, %v552
    %v571 = vsub.f32 %v523, %v554
    %v572 = vsub.f32 %v524, %v556
    %v573 = vmul.f32 %v557, 1.442695
    %v574 = vpow.pop %v573
    %v575 = vmul.f32 %v558, 1.442695
    %v576 = vpow.pop %v575
    %v577 = vmul.f32 %v559, 1.442695
    %v578 = vpow.pop %v577
    %v579 = vmul.f32 %v560, 1.442695
    %v580 = vpow.pop %v579
    %v581 = vmul.f32 %v561, 1.442695
    %v582 = vpow.pop %v581
    %v583 = vmul.f32 %v562, 1.442695
    %v584 = vpow.pop %v583
    %v585 = vmul.f32 %v563, 1.442695
    %v586 = vpow.pop %v585
    %v587 = vmul.f32 %v564, 1.442695
    %v588 = vpow.pop %v587
    %v589 = vmul.f32 %v565, 1.442695
    %v590 = vpow.pop %v589
    %v591 = vmul.f32 %v566, 1.442695
    %v592 = vpow.pop %v591
    %v593 = vmul.f32 %v567, 1.442695
    %v594 = vpow.pop %v593
    %v595 = vmul.f32 %v568, 1.442695
    %v596 = vpow.pop %v595
    %v597 = vmul.f32 %v569, 1.442695
    %v598 = vpow.pop %v597
    %v599 = vmul.f32 %v570, 1.442695
    %v600 = vpow.pop %v599
    %v601 = vmul.f32 %v571, 1.442695
    %v602 = vpow.pop %v601
    %v603 = vmul.f32 %v572, 1.442695
    %v604 = vpow.pop %v603
    %605 = vadd.xlane.f32.xlu0 %v574
    %v606 = vpop.xlane.xlu0 %605
    %607 = vadd.xlane.f32.xlu0 %v576
    %v608 = vpop.xlane.xlu0 %607
    %609 = vadd.xlane.f32.xlu0 %v578
    %v610 = vpop.xlane.xlu0 %609
    %611 = vadd.xlane.f32.xlu0 %v580
    %v612 = vpop.xlane.xlu0 %611
    %613 = vadd.xlane.f32.xlu0 %v582
    %v614 = vpop.xlane.xlu0 %613
    %615 = vadd.xlane.f32.xlu0 %v584
    %v616 = vpop.xlane.xlu0 %615
    %617 = vadd.xlane.f32.xlu0 %v586
    %v618 = vpop.xlane.xlu0 %617
    %619 = vadd.xlane.f32.xlu0 %v588
    %v620 = vpop.xlane.xlu0 %619
    %621 = vadd.xlane.f32.xlu0 %v590
    %v622 = vpop.xlane.xlu0 %621
    %623 = vadd.xlane.f32.xlu0 %v592
    %v624 = vpop.xlane.xlu0 %623
    %625 = vadd.xlane.f32.xlu0 %v594
    %v626 = vpop.xlane.xlu0 %625
    %627 = vadd.xlane.f32.xlu0 %v596
    %v628 = vpop.xlane.xlu0 %627
    %629 = vadd.xlane.f32.xlu0 %v598
    %v630 = vpop.xlane.xlu0 %629
    %631 = vadd.xlane.f32.xlu0 %v600
    %v632 = vpop.xlane.xlu0 %631
    %633 = vadd.xlane.f32.xlu0 %v602
    %v634 = vpop.xlane.xlu0 %633
    %635 = vadd.xlane.f32.xlu0 %v604
    %v636 = vpop.xlane.xlu0 %635
    %v637 = vlog2.pop %v606
    %v638 = vmul.f32 %v637, 0.6931472
    %v639 = vlog2.pop %v608
    %v640 = vmul.f32 %v639, 0.6931472
    %v641 = vlog2.pop %v610
    %v642 = vmul.f32 %v641, 0.6931472
    %v643 = vlog2.pop %v612
    %v644 = vmul.f32 %v643, 0.6931472
    %v645 = vlog2.pop %v614
    %v646 = vmul.f32 %v645, 0.6931472
    %v647 = vlog2.pop %v616
    %v648 = vmul.f32 %v647, 0.6931472
    %v649 = vlog2.pop %v618
    %v650 = vmul.f32 %v649, 0.6931472
    %v651 = vlog2.pop %v620
    %v652 = vmul.f32 %v651, 0.6931472
    %v653 = vlog2.pop %v622
    %v654 = vmul.f32 %v653, 0.6931472
    %v655 = vlog2.pop %v624
    %v656 = vmul.f32 %v655, 0.6931472
    %v657 = vlog2.pop %v626
    %v658 = vmul.f32 %v657, 0.6931472
    %v659 = vlog2.pop %v628
    %v660 = vmul.f32 %v659, 0.6931472
    %v661 = vlog2.pop %v630
    %v662 = vmul.f32 %v661, 0.6931472
    %v663 = vlog2.pop %v632
    %v664 = vmul.f32 %v663, 0.6931472
    %v665 = vlog2.pop %v634
    %v666 = vmul.f32 %v665, 0.6931472
    %v667 = vlog2.pop %v636
    %v668 = vmul.f32 %v667, 0.6931472
    %v669 = vsub.f32 %v557, %v638
    %v670 = vsub.f32 %v558, %v640
    %v671 = vsub.f32 %v559, %v642
    %v672 = vsub.f32 %v560, %v644
    %v673 = vsub.f32 %v561, %v646
    %v674 = vsub.f32 %v562, %v648
    %v675 = vsub.f32 %v563, %v650
    %v676 = vsub.f32 %v564, %v652
    %v677 = vsub.f32 %v565, %v654
    %v678 = vsub.f32 %v566, %v656
    %v679 = vsub.f32 %v567, %v658
    %v680 = vsub.f32 %v568, %v660
    %v681 = vsub.f32 %v569, %v662
    %v682 = vsub.f32 %v570, %v664
    %v683 = vsub.f32 %v571, %v666
    %v684 = vsub.f32 %v572, %v668
    %v685 = vsel %vm508, %v669, 0.0
    %v686 = vsel %vm508, %v670, 0.0
    %v687 = vsel %vm508, %v671, 0.0
    %v688 = vsel %vm508, %v672, 0.0
    %v689 = vsel %vm508, %v673, 0.0
    %v690 = vsel %vm508, %v674, 0.0
    %v691 = vsel %vm508, %v675, 0.0
    %v692 = vsel %vm508, %v676, 0.0
    %v693 = vsel %vm508, %v677, 0.0
    %v694 = vsel %vm508, %v678, 0.0
    %v695 = vsel %vm508, %v679, 0.0
    %v696 = vsel %vm508, %v680, 0.0
    %v697 = vsel %vm508, %v681, 0.0
    %v698 = vsel %vm508, %v682, 0.0
    %v699 = vsel %vm508, %v683, 0.0
    %v700 = vsel %vm508, %v684, 0.0
    %701 = vst [vmem:[%s4] sm:$0xff] %v685
    %702 = vst [vmem:[%s4 + $0x8] sm:$0xff] %v686
    %703 = vst [vmem:[%s4 + $0x10] sm:$0xff] %v687
    %704 = vst [vmem:[%s4 + $0x18] sm:$0xff] %v688
    %705 = vst [vmem:[%s4 + $0x20] sm:$0xff] %v689
    %706 = vst [vmem:[%s4 + $0x28] sm:$0xff] %v690
    %707 = vst [vmem:[%s4 + $0x30] sm:$0xff] %v691
    %708 = vst [vmem:[%s4 + $0x38] sm:$0xff] %v692
    %709 = vst [vmem:[%s4 + $0x40] sm:$0xff] %v693
    %710 = vst [vmem:[%s4 + $0x48] sm:$0xff] %v694
    %711 = vst [vmem:[%s4 + $0x50] sm:$0xff] %v695
    %712 = vst [vmem:[%s4 + $0x58] sm:$0xff] %v696
    %713 = vst [vmem:[%s4 + $0x60] sm:$0xff] %v697
    %714 = vst [vmem:[%s4 + $0x68] sm:$0xff] %v698
    %715 = vst [vmem:[%s4 + $0x70] sm:$0xff] %v699
    %716 = vst [vmem:[%s4 + $0x78] sm:$0xff] %v700
  $region25: #{gcn_forward.5} parent=0 // pred_fallthru
    _
  // Predicated region
  $region26: #{gcn_forward.5} parent=0 // pred_check
    _
  $region27: #{gcn_forward.5} parent=0 // pred_check_branch
    %718 = sbr.rel (0) target = $region29
  $region28: #{gcn_forward.5} parent=0 // pred_region
    _
  $region29: #{gcn_forward.5} parent=0 // pred_fallthru
    _
  // Predicated region
  $region30: #{gcn_forward.5} parent=0 // pred_check
    _
  $region31: #{gcn_forward.5} parent=0 // pred_check_branch
    %720 = sbr.rel (0) target = $region33
  $region32: #{gcn_forward.5} parent=0 // pred_region
    _
  $region33: #{gcn_forward.5} parent=0 // pred_fallthru
    _

</llo_original>
